<compile_context>
chip_gen: v7x
topology: tpu7x:2x2x1
jax: 0.10.0
libtpu: 0.0.40
codegen_flags: <defaults>
</compile_context>

<pallas_src>
import jax
import jax.numpy as jnp
from jax.experimental import pallas as pl
from jax.experimental.pallas import tpu as pltpu

EPS = 1e-5
_N_BN = 5  # number of BatchNorm layers (slab rows 0..4 = gamma, 5..9 = beta, 10 = linear bias)


def _conv1d_valid_im2col(x, w_flat):
    # x: (B, Lin, Cin); w_flat: (K*Cin, Cout).  Single fused MXU matmul.
    B, Lin, Cin = x.shape
    KC, Cout = w_flat.shape
    K = KC // Cin
    Lout = Lin - K + 1
    # im2col: pack the K tap slices along the lane axis -> (B, Lout, K*Cin)
    col = jnp.concatenate([x[:, k:k + Lout, :] for k in range(K)], axis=-1)
    y = jnp.dot(col.reshape(B * Lout, K * Cin), w_flat,
                preferred_element_type=jnp.float32)
    return y.reshape(B, Lout, Cout)


def _maxpool3s2(x):
    # MaxPool1d(kernel_size=3, stride=2), floor mode.
    B, L, C = x.shape
    Lout = (L - 3) // 2 + 1
    # one vectorized 3-way max over unit-stride shifted views
    m = jnp.maximum(jnp.maximum(x[:, 0:L - 2, :], x[:, 1:L - 1, :]), x[:, 2:L, :])
    if Lout == 1:
        return m[:, 0:1, :]
    # tiny static subsample (Lout is 1 or 2 for all valid input lengths)
    return jnp.concatenate([m[:, 2 * l:2 * l + 1, :] for l in range(Lout)], axis=1)


def cnn_encoder_kernel(x_ref, w1_ref, w2_ref, w3_ref, wl_ref, p_ref,
                       out_ref, pad_ref):
    # p_ref: (11, OUTP) packed params; rows 0..4 BN gammas, 5..9 BN betas
    # (lane-padded), row 10 linear bias (lane-padded to OUTP).

    def bn(h, idx):
        # training-mode BatchNorm1d: biased stats over (batch, length), folded
        # into a single per-channel scale/shift.
        C = h.shape[-1]
        g = p_ref[idx:idx + 1, 0:C]                      # (1, C)
        b = p_ref[_N_BN + idx:_N_BN + idx + 1, 0:C]      # (1, C)
        mean = jnp.mean(h, axis=(0, 1), keepdims=True)
        var = jnp.mean((h - mean) ** 2, axis=(0, 1), keepdims=True)
        s = g * jax.lax.rsqrt(var + EPS)                 # folded scale (EUP rsqrt)
        t = b - mean * s                                 # folded shift
        return h * s + t

    relu = lambda v: jnp.maximum(v, 0.0)

    x = x_ref[...]                                                  # (B, L, Cin)

    h = relu(bn(_conv1d_valid_im2col(x, w1_ref[...]), 0))           # conv1+BN+ReLU
    h = relu(bn(_conv1d_valid_im2col(h, w2_ref[...]), 1))           # conv2+BN+ReLU
    h = relu(bn(_maxpool3s2(h), 2))                                 # pool+BN+ReLU

    # Conv1d(32, 64, k=3, padding=2): zero padding via VMEM scratch (no
    # sublane-axis concatenate of zero pads).
    B, L2, C2 = h.shape
    pad_ref[...] = jnp.zeros_like(pad_ref)
    pad_ref[:, 2:2 + L2, :] = h
    h = relu(bn(_conv1d_valid_im2col(pad_ref[...], w3_ref[...]), 3))  # conv3+BN+ReLU

    h = bn(relu(_maxpool3s2(h)), 4)                                 # pool+ReLU+BN

    # flatten (final temporal length == 1, asserted in wrapper) + Linear
    code = h[:, 0, :]                                               # (B, 64)
    out_ref[...] = (jnp.dot(code, wl_ref[...],
                            preferred_element_type=jnp.float32)
                    + p_ref[2 * _N_BN:2 * _N_BN + 1, :])            # lane-dense store


def cnn_encoder_forward(x_ncl, params):
    # x_ncl: PyTorch-layout input (B, C_in, L)
    x = jnp.transpose(x_ncl, (0, 2, 1)).astype(jnp.float32)         # (B, L, Cin)
    B, L, Cin = x.shape

    # Static length bookkeeping; Linear(64, .) requires final temporal length 1.
    l1 = L - 4                      # conv1 (k=5, valid)
    l2 = l1 - 4                     # conv2 (k=5, valid)
    p1 = (l2 - 3) // 2 + 1          # maxpool(3,2)
    l3 = p1 + 2                     # conv3 (k=3, pad=2)
    p2 = (l3 - 3) // 2 + 1          # maxpool(3,2)
    assert l2 >= 3 and p2 == 1, (
        "CNNEncoder's Linear(64, .) requires final temporal length 1 "
        "(input length L must be in {11, 12, 13, 14}); got L=%d" % L)

    out_size = params["wl"].shape[1]
    outp = max(128, -(-out_size // 128) * 128)          # lane-dense output width

    def flat_conv_w(w):                                  # (K, Cin, Cout) -> (K*Cin, Cout)
        K, ci, co = w.shape
        return jnp.asarray(w, jnp.float32).reshape(K * ci, co)

    def lane_pad(v):                                     # -> (1, outp) lane-padded row
        v = jnp.asarray(v, jnp.float32).reshape(1, -1)
        return jnp.zeros((1, outp), jnp.float32).at[:, :v.shape[1]].set(v)

    # Packed small-parameter slab: 5 gammas, 5 betas, 1 linear bias -> one DMA.
    slab = jnp.concatenate(
        [lane_pad(params[k]) for k in ("g1", "g2", "g3", "g4", "g5")]
        + [lane_pad(params[k]) for k in ("b1", "b2", "b3", "b4", "b5")]
        + [lane_pad(params["bl"])], axis=0)              # (11, outp)

    wl_pad = jnp.zeros((64, outp), jnp.float32).at[:, :out_size].set(
        jnp.asarray(params["wl"], jnp.float32))

    vspec = pl.BlockSpec(memory_space=pltpu.MemorySpace.VMEM)
    y = pl.pallas_call(
        cnn_encoder_kernel,
        out_shape=jax.ShapeDtypeStruct((B, outp), jnp.float32),
        in_specs=[vspec] * 6,
        out_specs=vspec,
        scratch_shapes=[pltpu.VMEM((B, p1 + 4, 32), jnp.float32)],  # padded conv3 input
    )(x, flat_conv_w(params["w1"]), flat_conv_w(params["w2"]),
      flat_conv_w(params["w3"]), wl_pad, slab)
    return y[:, :out_size]


if __name__ == "__main__":
    B, C_IN, L, OUT = 2, 4, 14, 8   # L=14 -> final temporal length 1 (required by Linear(64, .))
    key = jax.random.PRNGKey(0)
    keys = jax.random.split(key, 6)

    x = jax.random.normal(keys[0], (B, C_IN, L), jnp.float32)

    def conv_w(k, K, cin, cout):
        return jax.random.normal(k, (K, cin, cout), jnp.float32) * (1.0 / (cin * K) ** 0.5)

    params = dict(
        w1=conv_w(keys[1], 5, C_IN, 32),
        w2=conv_w(keys[2], 5, 32, 32),
        w3=conv_w(keys[3], 3, 32, 64),
        # BatchNorm affine params at PyTorch default init (gamma=1, beta=0)
        g1=jnp.ones((32,), jnp.float32), b1=jnp.zeros((32,), jnp.float32),
        g2=jnp.ones((32,), jnp.float32), b2=jnp.zeros((32,), jnp.float32),
        g3=jnp.ones((32,), jnp.float32), b3=jnp.zeros((32,), jnp.float32),
        g4=jnp.ones((64,), jnp.float32), b4=jnp.zeros((64,), jnp.float32),
        g5=jnp.ones((64,), jnp.float32), b5=jnp.zeros((64,), jnp.float32),
        wl=jax.random.normal(keys[4], (64, OUT), jnp.float32) * (1.0 / 64 ** 0.5),
        bl=jax.random.normal(keys[5], (OUT,), jnp.float32) * 0.01,
    )

    out = cnn_encoder_forward(x, params)
    jax.block_until_ready(out)
    assert out.shape == (B, OUT)
    assert bool(jnp.all(jnp.isfinite(out)))
    print("KERNEL_OK")
</pallas_src>

<mosaic_0001>
module attributes {stable_mosaic.version = 11 : i64} {
  func.func @cnn_encoder_kernel(%arg0: memref<2x14x4xf32, #tpu.memory_space<vmem>>, %arg1: memref<20x32xf32, #tpu.memory_space<vmem>>, %arg2: memref<160x32xf32, #tpu.memory_space<vmem>>, %arg3: memref<96x64xf32, #tpu.memory_space<vmem>>, %arg4: memref<64x128xf32, #tpu.memory_space<vmem>>, %arg5: memref<11x128xf32, #tpu.memory_space<vmem>>, %arg6: memref<2x128xf32, #tpu.memory_space<vmem>>, %arg7: memref<2x6x32xf32, #tpu.memory_space<vmem>>) attributes {dimension_semantics = [], scalar_prefetch = 0 : i64, scratch_operands = 1 : i64, tpu.core_type = #tpu.core_type<tc>} {
    %c0 = arith.constant 0 : index
    %c0_0 = arith.constant 0 : index
    %c0_1 = arith.constant 0 : index
    %0 = vector.load %arg0[%c0, %c0_0, %c0_1] : memref<2x14x4xf32, #tpu.memory_space<vmem>>, vector<2x14x4xf32>
    %c0_2 = arith.constant 0 : index
    %c0_3 = arith.constant 0 : index
    %1 = vector.load %arg1[%c0_2, %c0_3] : memref<20x32xf32, #tpu.memory_space<vmem>>, vector<20x32xf32>
    %2 = vector.extract_strided_slice %0 {offsets = [0, 0, 0], sizes = [2, 10, 4], strides = [1, 1, 1]} : vector<2x14x4xf32> to vector<2x10x4xf32>
    %3 = vector.extract_strided_slice %0 {offsets = [0, 1, 0], sizes = [2, 10, 4], strides = [1, 1, 1]} : vector<2x14x4xf32> to vector<2x10x4xf32>
    %4 = vector.extract_strided_slice %0 {offsets = [0, 2, 0], sizes = [2, 10, 4], strides = [1, 1, 1]} : vector<2x14x4xf32> to vector<2x10x4xf32>
    %5 = vector.extract_strided_slice %0 {offsets = [0, 3, 0], sizes = [2, 10, 4], strides = [1, 1, 1]} : vector<2x14x4xf32> to vector<2x10x4xf32>
    %6 = vector.extract_strided_slice %0 {offsets = [0, 4, 0], sizes = [2, 10, 4], strides = [1, 1, 1]} : vector<2x14x4xf32> to vector<2x10x4xf32>
    %7 = tpu.concatenate %2, %3, %4, %5, %6 in 2 : vector<2x10x4xf32>, vector<2x10x4xf32>, vector<2x10x4xf32>, vector<2x10x4xf32>, vector<2x10x4xf32> -> vector<2x10x20xf32>
    %8 = vector.shape_cast %7 : vector<2x10x20xf32> to vector<20x20xf32>
    %cst = arith.constant dense<0.000000e+00> : vector<20x32xf32>
    %9 = tpu.matmul %8, %1, %cst {dimension_numbers = #tpu.dot_dimension_numbers<[1], [0], [0], [1], [0, 0, 1, 1], [], []>} : vector<20x20xf32>, vector<20x32xf32>, vector<20x32xf32> -> vector<20x32xf32>
    %10 = vector.shape_cast %9 : vector<20x32xf32> to vector<2x10x32xf32>
    %c0_4 = arith.constant 0 : index
    %c0_5 = arith.constant 0 : index
    %11 = vector.load %arg5[%c0_4, %c0_5] : memref<11x128xf32, #tpu.memory_space<vmem>>, vector<1x32xf32>
    %c5 = arith.constant 5 : index
    %c0_6 = arith.constant 0 : index
    %12 = vector.load %arg5[%c5, %c0_6] : memref<11x128xf32, #tpu.memory_space<vmem>>, vector<1x32xf32>
    %cst_7 = arith.constant dense<0.000000e+00> : vector<32xf32>
    %13 = vector.multi_reduction <add>, %10, %cst_7 [0, 1] : vector<2x10x32xf32> to vector<32xf32>
    %14 = vector.shape_cast %13 : vector<32xf32> to vector<1x1x32xf32>
    %cst_8 = arith.constant 2.000000e+01 : f32
    %15 = vector.broadcast %cst_8 : f32 to vector<1x1x32xf32>
    %16 = arith.divf %14, %15 : vector<1x1x32xf32>
    %17 = vector.broadcast %16 : vector<1x1x32xf32> to vector<2x10x32xf32>
    %18 = arith.subf %10, %17 : vector<2x10x32xf32>
    %19 = arith.mulf %18, %18 : vector<2x10x32xf32>
    %cst_9 = arith.constant dense<0.000000e+00> : vector<32xf32>
    %20 = vector.multi_reduction <add>, %19, %cst_9 [0, 1] : vector<2x10x32xf32> to vector<32xf32>
    %21 = vector.shape_cast %20 : vector<32xf32> to vector<1x1x32xf32>
    %cst_10 = arith.constant 2.000000e+01 : f32
    %22 = vector.broadcast %cst_10 : f32 to vector<1x1x32xf32>
    %23 = arith.divf %21, %22 : vector<1x1x32xf32>
    %cst_11 = arith.constant 9.99999974E-6 : f32
    %24 = vector.broadcast %cst_11 : f32 to vector<1x1x32xf32>
    %25 = arith.addf %23, %24 : vector<1x1x32xf32>
    %26 = math.rsqrt %25 : vector<1x1x32xf32>
    %27 = vector.shape_cast %11 : vector<1x32xf32> to vector<1x1x32xf32>
    %28 = arith.mulf %27, %26 : vector<1x1x32xf32>
    %29 = arith.mulf %16, %28 : vector<1x1x32xf32>
    %30 = vector.shape_cast %12 : vector<1x32xf32> to vector<1x1x32xf32>
    %31 = arith.subf %30, %29 : vector<1x1x32xf32>
    %32 = vector.broadcast %28 : vector<1x1x32xf32> to vector<2x10x32xf32>
    %33 = arith.mulf %10, %32 : vector<2x10x32xf32>
    %34 = vector.broadcast %31 : vector<1x1x32xf32> to vector<2x10x32xf32>
    %35 = arith.addf %33, %34 : vector<2x10x32xf32>
    %cst_12 = arith.constant 0.000000e+00 : f32
    %36 = vector.broadcast %cst_12 : f32 to vector<2x10x32xf32>
    %37 = arith.maximumf %35, %36 : vector<2x10x32xf32>
    %c0_13 = arith.constant 0 : index
    %c0_14 = arith.constant 0 : index
    %38 = vector.load %arg2[%c0_13, %c0_14] : memref<160x32xf32, #tpu.memory_space<vmem>>, vector<160x32xf32>
    %39 = vector.extract_strided_slice %37 {offsets = [0, 0, 0], sizes = [2, 6, 32], strides = [1, 1, 1]} : vector<2x10x32xf32> to vector<2x6x32xf32>
    %40 = vector.extract_strided_slice %37 {offsets = [0, 1, 0], sizes = [2, 6, 32], strides = [1, 1, 1]} : vector<2x10x32xf32> to vector<2x6x32xf32>
    %41 = vector.extract_strided_slice %37 {offsets = [0, 2, 0], sizes = [2, 6, 32], strides = [1, 1, 1]} : vector<2x10x32xf32> to vector<2x6x32xf32>
    %42 = vector.extract_strided_slice %37 {offsets = [0, 3, 0], sizes = [2, 6, 32], strides = [1, 1, 1]} : vector<2x10x32xf32> to vector<2x6x32xf32>
    %43 = vector.extract_strided_slice %37 {offsets = [0, 4, 0], sizes = [2, 6, 32], strides = [1, 1, 1]} : vector<2x10x32xf32> to vector<2x6x32xf32>
    %44 = tpu.concatenate %39, %40, %41, %42, %43 in 2 : vector<2x6x32xf32>, vector<2x6x32xf32>, vector<2x6x32xf32>, vector<2x6x32xf32>, vector<2x6x32xf32> -> vector<2x6x160xf32>
    %45 = vector.shape_cast %44 : vector<2x6x160xf32> to vector<12x160xf32>
    %cst_15 = arith.constant dense<0.000000e+00> : vector<12x32xf32>
    %46 = tpu.matmul %45, %38, %cst_15 {dimension_numbers = #tpu.dot_dimension_numbers<[1], [0], [0], [1], [0, 0, 1, 1], [], []>} : vector<12x160xf32>, vector<160x32xf32>, vector<12x32xf32> -> vector<12x32xf32>
    %47 = vector.shape_cast %46 : vector<12x32xf32> to vector<2x6x32xf32>
    %c1 = arith.constant 1 : index
    %c0_16 = arith.constant 0 : index
    %48 = vector.load %arg5[%c1, %c0_16] : memref<11x128xf32, #tpu.memory_space<vmem>>, vector<1x32xf32>
    %c6 = arith.constant 6 : index
    %c0_17 = arith.constant 0 : index
    %49 = vector.load %arg5[%c6, %c0_17] : memref<11x128xf32, #tpu.memory_space<vmem>>, vector<1x32xf32>
    %cst_18 = arith.constant dense<0.000000e+00> : vector<32xf32>
    %50 = vector.multi_reduction <add>, %47, %cst_18 [0, 1] : vector<2x6x32xf32> to vector<32xf32>
    %51 = vector.shape_cast %50 : vector<32xf32> to vector<1x1x32xf32>
    %cst_19 = arith.constant 1.200000e+01 : f32
    %52 = vector.broadcast %cst_19 : f32 to vector<1x1x32xf32>
    %53 = arith.divf %51, %52 : vector<1x1x32xf32>
    %54 = vector.broadcast %53 : vector<1x1x32xf32> to vector<2x6x32xf32>
    %55 = arith.subf %47, %54 : vector<2x6x32xf32>
    %56 = arith.mulf %55, %55 : vector<2x6x32xf32>
    %cst_20 = arith.constant dense<0.000000e+00> : vector<32xf32>
    %57 = vector.multi_reduction <add>, %56, %cst_20 [0, 1] : vector<2x6x32xf32> to vector<32xf32>
    %58 = vector.shape_cast %57 : vector<32xf32> to vector<1x1x32xf32>
    %cst_21 = arith.constant 1.200000e+01 : f32
    %59 = vector.broadcast %cst_21 : f32 to vector<1x1x32xf32>
    %60 = arith.divf %58, %59 : vector<1x1x32xf32>
    %cst_22 = arith.constant 9.99999974E-6 : f32
    %61 = vector.broadcast %cst_22 : f32 to vector<1x1x32xf32>
    %62 = arith.addf %60, %61 : vector<1x1x32xf32>
    %63 = math.rsqrt %62 : vector<1x1x32xf32>
    %64 = vector.shape_cast %48 : vector<1x32xf32> to vector<1x1x32xf32>
    %65 = arith.mulf %64, %63 : vector<1x1x32xf32>
    %66 = arith.mulf %53, %65 : vector<1x1x32xf32>
    %67 = vector.shape_cast %49 : vector<1x32xf32> to vector<1x1x32xf32>
    %68 = arith.subf %67, %66 : vector<1x1x32xf32>
    %69 = vector.broadcast %65 : vector<1x1x32xf32> to vector<2x6x32xf32>
    %70 = arith.mulf %47, %69 : vector<2x6x32xf32>
    %71 = vector.broadcast %68 : vector<1x1x32xf32> to vector<2x6x32xf32>
    %72 = arith.addf %70, %71 : vector<2x6x32xf32>
    %cst_23 = arith.constant 0.000000e+00 : f32
    %73 = vector.broadcast %cst_23 : f32 to vector<2x6x32xf32>
    %74 = arith.maximumf %72, %73 : vector<2x6x32xf32>
    %75 = vector.extract_strided_slice %74 {offsets = [0, 0, 0], sizes = [2, 4, 32], strides = [1, 1, 1]} : vector<2x6x32xf32> to vector<2x4x32xf32>
    %76 = vector.extract_strided_slice %74 {offsets = [0, 1, 0], sizes = [2, 4, 32], strides = [1, 1, 1]} : vector<2x6x32xf32> to vector<2x4x32xf32>
    %77 = arith.maximumf %75, %76 : vector<2x4x32xf32>
    %78 = vector.extract_strided_slice %74 {offsets = [0, 2, 0], sizes = [2, 4, 32], strides = [1, 1, 1]} : vector<2x6x32xf32> to vector<2x4x32xf32>
    %79 = arith.maximumf %77, %78 : vector<2x4x32xf32>
    %80 = vector.extract_strided_slice %79 {offsets = [0, 0, 0], sizes = [2, 1, 32], strides = [1, 1, 1]} : vector<2x4x32xf32> to vector<2x1x32xf32>
    %81 = vector.extract_strided_slice %79 {offsets = [0, 2, 0], sizes = [2, 1, 32], strides = [1, 1, 1]} : vector<2x4x32xf32> to vector<2x1x32xf32>
    %82 = tpu.concatenate %80, %81 in 1 : vector<2x1x32xf32>, vector<2x1x32xf32> -> vector<2x2x32xf32>
    %c2 = arith.constant 2 : index
    %c0_24 = arith.constant 0 : index
    %83 = vector.load %arg5[%c2, %c0_24] : memref<11x128xf32, #tpu.memory_space<vmem>>, vector<1x32xf32>
    %c7 = arith.constant 7 : index
    %c0_25 = arith.constant 0 : index
    %84 = vector.load %arg5[%c7, %c0_25] : memref<11x128xf32, #tpu.memory_space<vmem>>, vector<1x32xf32>
    %cst_26 = arith.constant dense<0.000000e+00> : vector<32xf32>
    %85 = vector.multi_reduction <add>, %82, %cst_26 [0, 1] : vector<2x2x32xf32> to vector<32xf32>
    %86 = vector.shape_cast %85 : vector<32xf32> to vector<1x1x32xf32>
    %cst_27 = arith.constant 4.000000e+00 : f32
    %87 = vector.broadcast %cst_27 : f32 to vector<1x1x32xf32>
    %88 = arith.divf %86, %87 : vector<1x1x32xf32>
    %89 = vector.broadcast %88 : vector<1x1x32xf32> to vector<2x2x32xf32>
    %90 = arith.subf %82, %89 : vector<2x2x32xf32>
    %91 = arith.mulf %90, %90 : vector<2x2x32xf32>
    %cst_28 = arith.constant dense<0.000000e+00> : vector<32xf32>
    %92 = vector.multi_reduction <add>, %91, %cst_28 [0, 1] : vector<2x2x32xf32> to vector<32xf32>
    %93 = vector.shape_cast %92 : vector<32xf32> to vector<1x1x32xf32>
    %cst_29 = arith.constant 4.000000e+00 : f32
    %94 = vector.broadcast %cst_29 : f32 to vector<1x1x32xf32>
    %95 = arith.divf %93, %94 : vector<1x1x32xf32>
    %cst_30 = arith.constant 9.99999974E-6 : f32
    %96 = vector.broadcast %cst_30 : f32 to vector<1x1x32xf32>
    %97 = arith.addf %95, %96 : vector<1x1x32xf32>
    %98 = math.rsqrt %97 : vector<1x1x32xf32>
    %99 = vector.shape_cast %83 : vector<1x32xf32> to vector<1x1x32xf32>
    %100 = arith.mulf %99, %98 : vector<1x1x32xf32>
    %101 = arith.mulf %88, %100 : vector<1x1x32xf32>
    %102 = vector.shape_cast %84 : vector<1x32xf32> to vector<1x1x32xf32>
    %103 = arith.subf %102, %101 : vector<1x1x32xf32>
    %104 = vector.broadcast %100 : vector<1x1x32xf32> to vector<2x2x32xf32>
    %105 = arith.mulf %82, %104 : vector<2x2x32xf32>
    %106 = vector.broadcast %103 : vector<1x1x32xf32> to vector<2x2x32xf32>
    %107 = arith.addf %105, %106 : vector<2x2x32xf32>
    %cst_31 = arith.constant 0.000000e+00 : f32
    %108 = vector.broadcast %cst_31 : f32 to vector<2x2x32xf32>
    %109 = arith.maximumf %107, %108 : vector<2x2x32xf32>
    %cst_32 = arith.constant 0.000000e+00 : f32
    %110 = vector.broadcast %cst_32 : f32 to vector<2x6x32xf32>
    %c0_33 = arith.constant 0 : index
    %c0_34 = arith.constant 0 : index
    %c0_35 = arith.constant 0 : index
    %111 = vector.load %arg7[%c0_33, %c0_34, %c0_35] : memref<2x6x32xf32, #tpu.memory_space<vmem>>, vector<2x6x32xf32>
    tpu.vector_store %arg7[%c0_33, %c0_34, %c0_35], %110 {strides = array<i32>} : memref<2x6x32xf32, #tpu.memory_space<vmem>>, vector<2x6x32xf32>,
    %c0_36 = arith.constant 0 : index
    %c2_37 = arith.constant 2 : index
    %c0_38 = arith.constant 0 : index
    %112 = vector.load %arg7[%c0_36, %c2_37, %c0_38] : memref<2x6x32xf32, #tpu.memory_space<vmem>>, vector<2x2x32xf32>
    tpu.vector_store %arg7[%c0_36, %c2_37, %c0_38], %109 {strides = array<i32>} : memref<2x6x32xf32, #tpu.memory_space<vmem>>, vector<2x2x32xf32>,
    %c0_39 = arith.constant 0 : index
    %c0_40 = arith.constant 0 : index
    %c0_41 = arith.constant 0 : index
    %113 = vector.load %arg7[%c0_39, %c0_40, %c0_41] : memref<2x6x32xf32, #tpu.memory_space<vmem>>, vector<2x6x32xf32>
    %c0_42 = arith.constant 0 : index
    %c0_43 = arith.constant 0 : index
    %114 = vector.load %arg3[%c0_42, %c0_43] : memref<96x64xf32, #tpu.memory_space<vmem>>, vector<96x64xf32>
    %115 = vector.extract_strided_slice %113 {offsets = [0, 0, 0], sizes = [2, 4, 32], strides = [1, 1, 1]} : vector<2x6x32xf32> to vector<2x4x32xf32>
    %116 = vector.extract_strided_slice %113 {offsets = [0, 1, 0], sizes = [2, 4, 32], strides = [1, 1, 1]} : vector<2x6x32xf32> to vector<2x4x32xf32>
    %117 = vector.extract_strided_slice %113 {offsets = [0, 2, 0], sizes = [2, 4, 32], strides = [1, 1, 1]} : vector<2x6x32xf32> to vector<2x4x32xf32>
    %118 = tpu.concatenate %115, %116, %117 in 2 : vector<2x4x32xf32>, vector<2x4x32xf32>, vector<2x4x32xf32> -> vector<2x4x96xf32>
    %119 = vector.shape_cast %118 : vector<2x4x96xf32> to vector<8x96xf32>
    %cst_44 = arith.constant dense<0.000000e+00> : vector<8x64xf32>
    %120 = tpu.matmul %119, %114, %cst_44 {dimension_numbers = #tpu.dot_dimension_numbers<[1], [0], [0], [1], [0, 0, 1, 1], [], []>} : vector<8x96xf32>, vector<96x64xf32>, vector<8x64xf32> -> vector<8x64xf32>
    %121 = vector.shape_cast %120 : vector<8x64xf32> to vector<2x4x64xf32>
    %c3 = arith.constant 3 : index
    %c0_45 = arith.constant 0 : index
    %122 = vector.load %arg5[%c3, %c0_45] : memref<11x128xf32, #tpu.memory_space<vmem>>, vector<1x64xf32>
    %c8 = arith.constant 8 : index
    %c0_46 = arith.constant 0 : index
    %123 = vector.load %arg5[%c8, %c0_46] : memref<11x128xf32, #tpu.memory_space<vmem>>, vector<1x64xf32>
    %cst_47 = arith.constant dense<0.000000e+00> : vector<64xf32>
    %124 = vector.multi_reduction <add>, %121, %cst_47 [0, 1] : vector<2x4x64xf32> to vector<64xf32>
    %125 = vector.shape_cast %124 : vector<64xf32> to vector<1x1x64xf32>
    %cst_48 = arith.constant 8.000000e+00 : f32
    %126 = vector.broadcast %cst_48 : f32 to vector<1x1x64xf32>
    %127 = arith.divf %125, %126 : vector<1x1x64xf32>
    %128 = vector.broadcast %127 : vector<1x1x64xf32> to vector<2x4x64xf32>
    %129 = arith.subf %121, %128 : vector<2x4x64xf32>
    %130 = arith.mulf %129, %129 : vector<2x4x64xf32>
    %cst_49 = arith.constant dense<0.000000e+00> : vector<64xf32>
    %131 = vector.multi_reduction <add>, %130, %cst_49 [0, 1] : vector<2x4x64xf32> to vector<64xf32>
    %132 = vector.shape_cast %131 : vector<64xf32> to vector<1x1x64xf32>
    %cst_50 = arith.constant 8.000000e+00 : f32
    %133 = vector.broadcast %cst_50 : f32 to vector<1x1x64xf32>
    %134 = arith.divf %132, %133 : vector<1x1x64xf32>
    %cst_51 = arith.constant 9.99999974E-6 : f32
    %135 = vector.broadcast %cst_51 : f32 to vector<1x1x64xf32>
    %136 = arith.addf %134, %135 : vector<1x1x64xf32>
    %137 = math.rsqrt %136 : vector<1x1x64xf32>
    %138 = vector.shape_cast %122 : vector<1x64xf32> to vector<1x1x64xf32>
    %139 = arith.mulf %138, %137 : vector<1x1x64xf32>
    %140 = arith.mulf %127, %139 : vector<1x1x64xf32>
    %141 = vector.shape_cast %123 : vector<1x64xf32> to vector<1x1x64xf32>
    %142 = arith.subf %141, %140 : vector<1x1x64xf32>
    %143 = vector.broadcast %139 : vector<1x1x64xf32> to vector<2x4x64xf32>
    %144 = arith.mulf %121, %143 : vector<2x4x64xf32>
    %145 = vector.broadcast %142 : vector<1x1x64xf32> to vector<2x4x64xf32>
    %146 = arith.addf %144, %145 : vector<2x4x64xf32>
    %cst_52 = arith.constant 0.000000e+00 : f32
    %147 = vector.broadcast %cst_52 : f32 to vector<2x4x64xf32>
    %148 = arith.maximumf %146, %147 : vector<2x4x64xf32>
    %149 = vector.extract_strided_slice %148 {offsets = [0, 0, 0], sizes = [2, 2, 64], strides = [1, 1, 1]} : vector<2x4x64xf32> to vector<2x2x64xf32>
    %150 = vector.extract_strided_slice %148 {offsets = [0, 1, 0], sizes = [2, 2, 64], strides = [1, 1, 1]} : vector<2x4x64xf32> to vector<2x2x64xf32>
    %151 = arith.maximumf %149, %150 : vector<2x2x64xf32>
    %152 = vector.extract_strided_slice %148 {offsets = [0, 2, 0], sizes = [2, 2, 64], strides = [1, 1, 1]} : vector<2x4x64xf32> to vector<2x2x64xf32>
    %153 = arith.maximumf %151, %152 : vector<2x2x64xf32>
    %154 = vector.extract_strided_slice %153 {offsets = [0, 0, 0], sizes = [2, 1, 64], strides = [1, 1, 1]} : vector<2x2x64xf32> to vector<2x1x64xf32>
    %cst_53 = arith.constant 0.000000e+00 : f32
    %155 = vector.broadcast %cst_53 : f32 to vector<2x1x64xf32>
    %156 = arith.maximumf %154, %155 : vector<2x1x64xf32>
    %c4 = arith.constant 4 : index
    %c0_54 = arith.constant 0 : index
    %157 = vector.load %arg5[%c4, %c0_54] : memref<11x128xf32, #tpu.memory_space<vmem>>, vector<1x64xf32>
    %c9 = arith.constant 9 : index
    %c0_55 = arith.constant 0 : index
    %158 = vector.load %arg5[%c9, %c0_55] : memref<11x128xf32, #tpu.memory_space<vmem>>, vector<1x64xf32>
    %cst_56 = arith.constant dense<0.000000e+00> : vector<64xf32>
    %159 = vector.multi_reduction <add>, %156, %cst_56 [0, 1] : vector<2x1x64xf32> to vector<64xf32>
    %160 = vector.shape_cast %159 : vector<64xf32> to vector<1x1x64xf32>
    %cst_57 = arith.constant 2.000000e+00 : f32
    %161 = vector.broadcast %cst_57 : f32 to vector<1x1x64xf32>
    %162 = arith.divf %160, %161 : vector<1x1x64xf32>
    %163 = vector.broadcast %162 : vector<1x1x64xf32> to vector<2x1x64xf32>
    %164 = arith.subf %156, %163 : vector<2x1x64xf32>
    %165 = arith.mulf %164, %164 : vector<2x1x64xf32>
    %cst_58 = arith.constant dense<0.000000e+00> : vector<64xf32>
    %166 = vector.multi_reduction <add>, %165, %cst_58 [0, 1] : vector<2x1x64xf32> to vector<64xf32>
    %167 = vector.shape_cast %166 : vector<64xf32> to vector<1x1x64xf32>
    %cst_59 = arith.constant 2.000000e+00 : f32
    %168 = vector.broadcast %cst_59 : f32 to vector<1x1x64xf32>
    %169 = arith.divf %167, %168 : vector<1x1x64xf32>
    %cst_60 = arith.constant 9.99999974E-6 : f32
    %170 = vector.broadcast %cst_60 : f32 to vector<1x1x64xf32>
    %171 = arith.addf %169, %170 : vector<1x1x64xf32>
    %172 = math.rsqrt %171 : vector<1x1x64xf32>
    %173 = vector.shape_cast %157 : vector<1x64xf32> to vector<1x1x64xf32>
    %174 = arith.mulf %173, %172 : vector<1x1x64xf32>
    %175 = arith.mulf %162, %174 : vector<1x1x64xf32>
    %176 = vector.shape_cast %158 : vector<1x64xf32> to vector<1x1x64xf32>
    %177 = arith.subf %176, %175 : vector<1x1x64xf32>
    %178 = vector.broadcast %174 : vector<1x1x64xf32> to vector<2x1x64xf32>
    %179 = arith.mulf %156, %178 : vector<2x1x64xf32>
    %180 = vector.broadcast %177 : vector<1x1x64xf32> to vector<2x1x64xf32>
    %181 = arith.addf %179, %180 : vector<2x1x64xf32>
    %182 = vector.shape_cast %181 : vector<2x1x64xf32> to vector<2x64xf32>
    %c0_61 = arith.constant 0 : index
    %c0_62 = arith.constant 0 : index
    %183 = vector.load %arg4[%c0_61, %c0_62] : memref<64x128xf32, #tpu.memory_space<vmem>>, vector<64x128xf32>
    %cst_63 = arith.constant dense<0.000000e+00> : vector<2x128xf32>
    %184 = tpu.matmul %182, %183, %cst_63 {dimension_numbers = #tpu.dot_dimension_numbers<[1], [0], [0], [1], [0, 0, 1, 1], [], []>} : vector<2x64xf32>, vector<64x128xf32>, vector<2x128xf32> -> vector<2x128xf32>
    %c10 = arith.constant 10 : index
    %c0_64 = arith.constant 0 : index
    %185 = vector.load %arg5[%c10, %c0_64] : memref<11x128xf32, #tpu.memory_space<vmem>>, vector<1x128xf32>
    %186 = vector.broadcast %185 : vector<1x128xf32> to vector<2x128xf32>
    %187 = arith.addf %184, %186 : vector<2x128xf32>
    %c0_65 = arith.constant 0 : index
    %c0_66 = arith.constant 0 : index
    %188 = vector.load %arg6[%c0_65, %c0_66] : memref<2x128xf32, #tpu.memory_space<vmem>>, vector<2x128xf32>
    tpu.vector_store %arg6[%c0_65, %c0_66], %187 {strides = array<i32>} : memref<2x128xf32, #tpu.memory_space<vmem>>, vector<2x128xf32>,
    return
  }
}

</mosaic_0001>

<llo_original>
// kernel: tpu_custom_call.1
$region0: #{tpu_custom_call.1}
  #allocation0 [shape = 'u32[]', space=smem, size = 0x4, offset = 0x4, fixed_abs, tag = 'smem constant byte address 0x4 - core index']
  #allocation1 [shape = 'u32[144,128]{1,0:T(1,128)}', space=vmem, size = 0x12000, scoped, tag = 'internal scratch']
  #allocation2 [shape = 'f32[2,6,32]{2,1,0:T(8,128)}', space=vmem, size = 0x2000, scoped, tag = 'scratch operand']
  %s0 = inlined_call_operand.vmem [shape: f32[2,14,4], index: 0, kind: input, shape index: {}]
  %s1 = inlined_call_operand.vmem [shape: f32[20,32], index: 1, kind: input, shape index: {}]
  %s2 = inlined_call_operand.vmem [shape: f32[160,32], index: 2, kind: input, shape index: {}]
  %s3 = inlined_call_operand.vmem [shape: f32[96,64], index: 3, kind: input, shape index: {}]
  %s4 = inlined_call_operand.vmem [shape: f32[64,128], index: 4, kind: input, shape index: {}]
  %s5 = inlined_call_operand.vmem [shape: f32[11,128], index: 5, kind: input, shape index: {}]
  %s6 = inlined_call_operand.hbm [shape: f32[2,128], index: 6, kind: output, shape index: {}]
  %s7 = sld [smem:[#allocation0]]
  $region34: #{tpu_custom_call.1} parent=0
    _
  %s9 = ssub.s32 1, %s7
  %s10 = scalar_select 0, %s9, %s7
  $region1: #{tpu_custom_call.1} parent=0
    #allocation3 [shape = 'u8[1024]{0}', space=vmem, size = 0x400, scoped, tag = 'output window, operand 0, single buffered']
    #allocation4 [shape = 's32[1]{0}', space=sflag, size = 0x4, scoped, tag = 'scoped memory for tpu_custom_call.1']
    %11 = vsyncpa [#allocation4], 0
    // Predicated region
    $region2: #{tpu_custom_call.1} parent=1 // pred_check
      _
    $region3: #{tpu_custom_call.1} parent=1 // pred_check_branch
      %13 = sbr.rel (0) target = $region5
    $region4: #{tpu_custom_call.1} parent=1 // pred_region
      _
    $region5: #{tpu_custom_call.1} parent=1 // pred_fallthru
      _
    // Predicated region
    $region6: #{tpu_custom_call.1} parent=1 // pred_check
      _
    $region7: #{tpu_custom_call.1} parent=1 // pred_check_branch
      %15 = sbr.rel (0) target = $region9
    $region8: #{tpu_custom_call.1} parent=1 // pred_region
      _
    $region9: #{tpu_custom_call.1} parent=1 // pred_fallthru
      _
    // Predicated region
    $region10: #{tpu_custom_call.1} parent=1 // pred_check
      _
    $region11: #{tpu_custom_call.1} parent=1 // pred_check_branch
      %17 = sbr.rel (0) target = $region13
    $region12: #{tpu_custom_call.1} parent=1 // pred_region
      _
    $region13: #{tpu_custom_call.1} parent=1 // pred_fallthru
      _
    // Predicated region
    $region14: #{tpu_custom_call.1} parent=1 // pred_check
      _
    $region15: #{tpu_custom_call.1} parent=1 // pred_check_branch
      %19 = sbr.rel (0) target = $region17
    $region16: #{tpu_custom_call.1} parent=1 // pred_region
      _
    $region17: #{tpu_custom_call.1} parent=1 // pred_fallthru
      _
    // Predicated region
    $region18: #{tpu_custom_call.1} parent=1 // pred_check
      _
    $region19: #{tpu_custom_call.1} parent=1 // pred_check_branch
      %21 = sbr.rel (0) target = $region21
    $region20: #{tpu_custom_call.1} parent=1 // pred_region
      _
    $region21: #{tpu_custom_call.1} parent=1 // pred_fallthru
      _
    // Predicated region
    $region22: #{tpu_custom_call.1} parent=1 // pred_check
      _
    $region23: #{tpu_custom_call.1} parent=1 // pred_check_branch
      %23 = sbr.rel (0) target = $region25
    $region24: #{tpu_custom_call.1} parent=1 // pred_region
      _
    $region25: #{tpu_custom_call.1} parent=1 // pred_fallthru
      _
    %v24 = vld [vmem:[%s0] sm:$0xff]
    %v25 = vld [vmem:[%s0 + $0x8] sm:$0x3f]
    %v26 = vld [vmem:[%s0 + $0x10] sm:$0xff]
    %v27 = vld [vmem:[%s0 + $0x18] sm:$0x3f]
    %v28 = vld [vmem:[%s1] sm:$0xff]
    %v29 = vld [vmem:[%s1 + $0x8] sm:$0xff]
    %v30 = vld [vmem:[%s1 + $0x10] sm:$0xf]
    %vm35 = vcmask 1046528
    %v36 = vrot.slane %v24, 1
    %v37 = vrot.slane %v25, 1
    %v38 = vsel %vm35, %v36, %v37
    %v39 = vrot.slane %v26, 1
    %v40 = vrot.slane %v27, 1
    %v41 = vsel %vm35, %v39, %v40
    %42 = vrot.lane.b32.xlu0 %v38, 4
    %v43 = vpop.permute.xlu0 %42
    %44 = vrot.lane.b32.xlu0 %v37, 4
    %v45 = vpop.permute.xlu0 %44
    %46 = vrot.lane.b32.xlu0 %v41, 4
    %v47 = vpop.permute.xlu0 %46
    %48 = vrot.lane.b32.xlu0 %v40, 4
    %v49 = vpop.permute.xlu0 %48
    %vm54 = vcmask 1045504
    %v55 = vrot.slane %v24, 2
    %v56 = vrot.slane %v25, 2
    %v57 = vsel %vm54, %v55, %v56
    %v58 = vrot.slane %v26, 2
    %v59 = vrot.slane %v27, 2
    %v60 = vsel %vm54, %v58, %v59
    %61 = vrot.lane.b32.xlu0 %v57, 8
    %v62 = vpop.permute.xlu0 %61
    %63 = vrot.lane.b32.xlu0 %v56, 8
    %v64 = vpop.permute.xlu0 %63
    %65 = vrot.lane.b32.xlu0 %v60, 8
    %v66 = vpop.permute.xlu0 %65
    %67 = vrot.lane.b32.xlu0 %v59, 8
    %v68 = vpop.permute.xlu0 %67
    %vm73 = vcmask 1044480
    %v74 = vrot.slane %v24, 3
    %v75 = vrot.slane %v25, 3
    %v76 = vsel %vm73, %v74, %v75
    %v77 = vrot.slane %v26, 3
    %v78 = vrot.slane %v27, 3
    %v79 = vsel %vm73, %v77, %v78
    %80 = vrot.lane.b32.xlu0 %v76, 12
    %v81 = vpop.permute.xlu0 %80
    %82 = vrot.lane.b32.xlu0 %v75, 12
    %v83 = vpop.permute.xlu0 %82
    %84 = vrot.lane.b32.xlu0 %v79, 12
    %v85 = vpop.permute.xlu0 %84
    %86 = vrot.lane.b32.xlu0 %v78, 12
    %v87 = vpop.permute.xlu0 %86
    %vm92 = vcmask 1043456
    %v93 = vrot.slane %v24, 4
    %v94 = vrot.slane %v25, 4
    %v95 = vsel %vm92, %v93, %v94
    %v96 = vrot.slane %v26, 4
    %v97 = vrot.slane %v27, 4
    %v98 = vsel %vm92, %v96, %v97
    %99 = vrot.lane.b32.xlu0 %v95, 16
    %v100 = vpop.permute.xlu0 %99
    %101 = vrot.lane.b32.xlu0 %v94, 16
    %v102 = vpop.permute.xlu0 %101
    %103 = vrot.lane.b32.xlu0 %v98, 16
    %v104 = vpop.permute.xlu0 %103
    %105 = vrot.lane.b32.xlu0 %v97, 16
    %v106 = vpop.permute.xlu0 %105
    %vm111 = vcmask 31744
    %v112 = vsel %vm111, %v24, %v43
    %v113 = vsel %vm111, %v25, %v45
    %v114 = vsel %vm111, %v26, %v47
    %v115 = vsel %vm111, %v27, %v49
    %vm116 = vcmask 64512
    %v117 = vsel %vm116, %v112, %v62
    %v118 = vsel %vm116, %v113, %v64
    %v119 = vsel %vm116, %v114, %v66
    %v120 = vsel %vm116, %v115, %v68
    %vm121 = vcmask 97280
    %v122 = vsel %vm121, %v117, %v81
    %v123 = vsel %vm121, %v118, %v83
    %v124 = vsel %vm121, %v119, %v85
    %v125 = vsel %vm121, %v120, %v87
    %vm126 = vcmask 130048
    %v127 = vsel %vm126, %v122, %v100
    %v128 = vsel %vm126, %v123, %v102
    %v129 = vsel %vm126, %v124, %v104
    %v130 = vsel %vm126, %v125, %v106
    %v135 = vcombine.high %v127, %v127
    %v137 = vunpack.c.l.s4 1983009808
    %v138 = vunpack.c.0.s8 %v137
    %v139 = vlaneseq
    %v140 = vshrl.u32 %v139, 7
    %v141 = vsub.s32 %v138, %v140
    %v142 = vrot.slane %v127, %v141
    %v144 = vunpack.c.l.s4 1983009808
    %v145 = vunpack.c.0.s8 %v144
    %v146 = vlaneseq
    %v147 = vshrl.u32 %v146, 7
    %v148 = vsub.s32 %v145, %v147
    %v149 = vrot.slane %v135, %v148
    %v150 = vcombine.high %v142, %v142
    %v151 = vcombine.high %v149, %v149
    %v153 = vunpack.c.l.s4 1983009808
    %v154 = vunpack.c.0.s8 %v153
    %v155 = vlaneseq
    %v156 = vshrl.u32 %v155, 7
    %v157 = vsub.s32 %v154, %v156
    %v158 = vrot.slane %v128, %v157
    %v159 = vcombine.high %v129, %v129
    %v161 = vunpack.c.l.s4 1983009808
    %v162 = vunpack.c.0.s8 %v161
    %v163 = vlaneseq
    %v164 = vshrl.u32 %v163, 7
    %v165 = vsub.s32 %v162, %v164
    %v166 = vrot.slane %v129, %v165
    %v168 = vunpack.c.l.s4 1983009808
    %v169 = vunpack.c.0.s8 %v168
    %v170 = vlaneseq
    %v171 = vshrl.u32 %v170, 7
    %v172 = vsub.s32 %v169, %v171
    %v173 = vrot.slane %v159, %v172
    %v174 = vcombine.high %v166, %v166
    %v175 = vcombine.high %v173, %v173
    %v177 = vunpack.c.l.s4 1983009808
    %v178 = vunpack.c.0.s8 %v177
    %v179 = vlaneseq
    %v180 = vshrl.u32 %v179, 7
    %v181 = vsub.s32 %v178, %v180
    %v182 = vrot.slane %v130, %v181
    %v183 = vcombine.low %v142, %v150
    %v184 = vcombine.low %v149, %v151
    %v186 = vunpack.c.l.s4 1983009808
    %v187 = vunpack.c.0.s8 %v186
    %v188 = vlaneseq
    %v189 = vshrl.u32 %v188, 7
    %v190 = vsub.s32 %v187, %v189
    %v191 = vrot.slane %v183, %v190
    %v193 = vunpack.c.l.s4 1983009808
    %v194 = vunpack.c.0.s8 %v193
    %v195 = vlaneseq
    %v196 = vshrl.u32 %v195, 7
    %v197 = vsub.s32 %v194, %v196
    %v198 = vrot.slane %v184, %v197
    %v199 = vcombine.low %v191, %v198
    %v200 = vcombine.low %v158, %v166
    %v201 = vcombine.low %v174, %v173
    %v203 = vunpack.c.l.s4 1983009808
    %v204 = vunpack.c.0.s8 %v203
    %v205 = vlaneseq
    %v206 = vshrl.u32 %v205, 7
    %v207 = vsub.s32 %v204, %v206
    %v208 = vrot.slane %v200, %v207
    %v210 = vunpack.c.l.s4 1983009808
    %v211 = vunpack.c.0.s8 %v210
    %v212 = vlaneseq
    %v213 = vshrl.u32 %v212, 7
    %v214 = vsub.s32 %v211, %v213
    %v215 = vrot.slane %v201, %v214
    %v216 = vcombine.low %v208, %v215
    %v217 = vcombine.low %v175, %v182
    %v219 = vunpack.c.l.s4 1983009808
    %v220 = vunpack.c.0.s8 %v219
    %v221 = vlaneseq
    %v222 = vshrl.u32 %v221, 7
    %v223 = vsub.s32 %v220, %v222
    %v224 = vrot.slane %v217, %v223
    %vm225 = vcmask 162816
    %v226 = vsel %vm225, %v199, 0
    %v228 = vsel %vm225, %v216, 0
    %v230 = vsel %vm225, %v224, 0
    %v233 = vsel %vm92, %v30, 0
    %235 = vmatprep.subr.mxu0 0.0
    %236 = vmatpush1.msra.mxu0 %v28
    %237 = vmatprep.subr.mxu0 0.0
    %238 = vmatpush1.msra.mxu0 %v29
    %239 = vmatprep.subr.mxu0 0.0
    %240 = vmatpush1.msra.mxu0 %v233
    %241 = vmatprep.subr.mxu0 0.0
    %242 = vmatpush1.msra.mxu0 0.0
    %243 = vmatprep.subr.mxu0 0.0
    %244 = vmatpush1.msra.mxu0 0.0
    %245 = vmatprep.subr.mxu0 0.0
    %246 = vmatpush1.msra.mxu0 0.0
    %247 = vmatprep.subr.mxu0 0.0
    %248 = vmatpush1.msra.mxu0 0.0
    %249 = vmatprep.subr.mxu0 0.0
    %250 = vmatpush1.msra.mxu0 0.0
    %251 = vmatprep.subr.mxu0 0.0
    %252 = vmatpush1.msra.mxu0 0.0
    %253 = vmatprep.subr.mxu0 0.0
    %254 = vmatpush1.msra.mxu0 0.0
    %255 = vmatprep.subr.mxu0 0.0
    %256 = vmatpush1.msra.mxu0 0.0
    %257 = vmatprep.subr.mxu0 0.0
    %258 = vmatpush1.msra.mxu0 0.0
    %259 = vmatprep.subr.mxu0 0.0
    %260 = vmatpush1.msra.mxu0 0.0
    %261 = vmatprep.subr.mxu0 0.0
    %262 = vmatpush1.msra.mxu0 0.0
    %263 = vmatprep.subr.mxu0 0.0
    %264 = vmatpush1.msra.mxu0 0.0
    %265 = vmatprep.subr.mxu0 0.0
    %266 = vmatpush1.msra.mxu0 0.0
    %267 = vmatprep.subr.mxu0 0.0
    %268 = vmatpush1.msra.mxu0 0.0
    %269 = vmatprep.subr.mxu0 0.0
    %270 = vmatpush1.msra.mxu0 0.0
    %271 = vmatprep.subr.mxu0 0.0
    %272 = vmatpush1.msra.mxu0 0.0
    %273 = vmatprep.subr.mxu0 0.0
    %274 = vmatpush1.msra.mxu0 0.0
    %275 = vmatprep.subr.mxu0 0.0
    %276 = vmatpush1.msra.mxu0 0.0
    %277 = vmatprep.subr.mxu0 0.0
    %278 = vmatpush1.msra.mxu0 0.0
    %279 = vmatprep.subr.mxu0 0.0
    %280 = vmatpush1.msra.mxu0 0.0
    %281 = vmatprep.subr.mxu0 0.0
    %282 = vmatpush1.msra.mxu0 0.0
    %283 = vmatprep.subr.mxu0 0.0
    %284 = vmatpush1.msra.mxu0 0.0
    %285 = vmatprep.subr.mxu0 0.0
    %286 = vmatpush1.msra.mxu0 0.0
    %287 = vmatprep.subr.mxu0 0.0
    %288 = vmatpush1.msra.mxu0 0.0
    %289 = vmatprep.subr.mxu0 0.0
    %290 = vmatpush1.msra.mxu0 0.0
    %291 = vmatprep.subr.mxu0 0.0
    %292 = vmatpush1.msra.mxu0 0.0
    %293 = vmatprep.subr.mxu0 0.0
    %294 = vmatpush1.msra.mxu0 0.0
    %295 = vmatprep.subr.mxu0 0.0
    %296 = vmatpush1.msra.mxu0 0.0
    %297 = vmatprep.subr.mxu0 0.0
    %298 = vmatpush1.msra.mxu0 0.0
    %299 = vmatprep.mubr.f32.mxu0 0.0
    %300 = vmatmul.mubr.f32.gmra.mrb[0].mxu0 %v226
    %v301 = vpop.f32.mrb[0].mxu0
    %v302 = vadd.f32 0.0, %v301
    %v303 = vpop.f32.mrb[0].mxu0
    %304 = vmatprep.mubr.f32.mxu0 0.0
    %305 = vmatmul.mubr.f32.gmra.mrb[0].mxu0 %v228
    %v306 = vpop.f32.mrb[0].mxu0
    %v307 = vadd.f32 0.0, %v306
    %v308 = vpop.f32.mrb[0].mxu0
    %309 = vmatprep.mubr.f32.mxu0 0.0
    %310 = vmatmul.mubr.f32.gmra.mrb[0].mxu0 %v230
    %v311 = vpop.f32.mrb[0].mxu0
    %v312 = vadd.f32 0.0, %v311
    %v313 = vpop.f32.mrb[0].mxu0
    %314 = vdwg.mxu0
    %v318 = vcombine.high %v302, %v302
    %v320 = vunpack.c.l.s4 1983009808
    %v321 = vunpack.c.0.s8 %v320
    %v322 = vlaneseq
    %v323 = vshrl.u32 %v322, 7
    %v324 = vsub.s32 %v321, %v323
    %v325 = vrot.slane %v302, %v324
    %v327 = vunpack.c.l.s4 1983009808
    %v328 = vunpack.c.0.s8 %v327
    %v329 = vlaneseq
    %v330 = vshrl.u32 %v329, 7
    %v331 = vsub.s32 %v328, %v330
    %v332 = vrot.slane %v318, %v331
    %v333 = vcombine.high %v325, %v325
    %v334 = vcombine.high %v332, %v332
    %v335 = vcombine.high %v307, %v307
    %v337 = vunpack.c.l.s4 1983009808
    %v338 = vunpack.c.0.s8 %v337
    %v339 = vlaneseq
    %v340 = vshrl.u32 %v339, 7
    %v341 = vsub.s32 %v338, %v340
    %v342 = vrot.slane %v307, %v341
    %v344 = vunpack.c.l.s4 1983009808
    %v345 = vunpack.c.0.s8 %v344
    %v346 = vlaneseq
    %v347 = vshrl.u32 %v346, 7
    %v348 = vsub.s32 %v345, %v347
    %v349 = vrot.slane %v335, %v348
    %v350 = vcombine.high %v342, %v342
    %v351 = vcombine.high %v349, %v349
    %v353 = vunpack.c.l.s4 1983009808
    %v354 = vunpack.c.0.s8 %v353
    %v355 = vlaneseq
    %v356 = vshrl.u32 %v355, 7
    %v357 = vsub.s32 %v354, %v356
    %v358 = vrot.slane %v312, %v357
    %v359 = vcombine.high %v358, %v358
    %v370 = vld [vmem:[%s5] sm:$0x1]
    %v371 = vld [vmem:[%s5 + $0x5] sm:$0x1]
    %v372 = vcombine.low %v325, %v333
    %v373 = vcombine.low %v332, %v334
    %v375 = vunpack.c.l.s4 1983009808
    %v376 = vunpack.c.0.s8 %v375
    %v377 = vlaneseq
    %v378 = vshrl.u32 %v377, 7
    %v379 = vsub.s32 %v376, %v378
    %v380 = vrot.slane %v372, %v379
    %v382 = vunpack.c.l.s4 1983009808
    %v383 = vunpack.c.0.s8 %v382
    %v384 = vlaneseq
    %v385 = vshrl.u32 %v384, 7
    %v386 = vsub.s32 %v383, %v385
    %v387 = vrot.slane %v373, %v386
    %v388 = vcombine.low %v380, %v387
    %v390 = vunpack.c.l.s4 1983009808
    %v391 = vunpack.c.0.s8 %v390
    %v392 = vlaneseq
    %v393 = vshrl.u32 %v392, 7
    %v394 = vsub.s32 %v391, %v393
    %v395 = vrot.slane %v342, %v394
    %v396 = vcombine.low %v350, %v349
    %v397 = vcombine.low %v351, %v358
    %v399 = vunpack.c.l.s4 1983009808
    %v400 = vunpack.c.0.s8 %v399
    %v401 = vlaneseq
    %v402 = vshrl.u32 %v401, 7
    %v403 = vsub.s32 %v400, %v402
    %v404 = vrot.slane %v396, %v403
    %v406 = vunpack.c.l.s4 1983009808
    %v407 = vunpack.c.0.s8 %v406
    %v408 = vlaneseq
    %v409 = vshrl.u32 %v408, 7
    %v410 = vsub.s32 %v407, %v409
    %v411 = vrot.slane %v397, %v410
    %v412 = vcombine.low %v404, %v411
    %v414 = vunpack.c.l.s4 1983009808
    %v415 = vunpack.c.0.s8 %v414
    %v416 = vlaneseq
    %v417 = vshrl.u32 %v416, 7
    %v418 = vsub.s32 %v415, %v417
    %v419 = vrot.slane %v359, %v418
    %vm424 = vcmask 261120
    %v425 = vsel %vm424, %v388, 0.0
    %vm426 = vcmask 254976
    %v427 = vsel %vm426, %v395, 0.0
    %v428 = vadd.f32 %v425, %v427
    %v429 = vsel %vm424, %v412, 0.0
    %v430 = vadd.f32 %v428, %v429
    %v431 = vsel %vm426, %v419, 0.0
    %v432 = vadd.f32 %v430, %v431
    %v433 = vrot.slane %v432, 4
    %v434 = vadd.f32 %v432, %v433
    %v435 = vrot.slane %v434, 2
    %v436 = vadd.f32 %v434, %v435
    %v437 = vrot.slane %v436, 1
    %v438 = vadd.f32 %v436, %v437
    %v439 = vrcp.pop 20.0
    %v440 = vmul.f32 %v438, %v439
    %v442 = vcombine.high %v440, %v440
    %v444 = vunpack.c.l.s4 1983009808
    %v445 = vunpack.c.0.s8 %v444
    %v446 = vlaneseq
    %v447 = vshrl.u32 %v446, 7
    %v448 = vsub.s32 %v445, %v447
    %v449 = vrot.slane %v440, %v448
    %v451 = vunpack.c.l.s4 1983009808
    %v452 = vunpack.c.0.s8 %v451
    %v453 = vlaneseq
    %v454 = vshrl.u32 %v453, 7
    %v455 = vsub.s32 %v452, %v454
    %v456 = vrot.slane %v442, %v455
    %v457 = vcombine.high %v449, %v449
    %v458 = vcombine.high %v456, %v456
    %v463 = vsub.f32 %v325, %v449
    %v464 = vsub.f32 %v333, %v457
    %v465 = vsub.f32 %v332, %v456
    %v466 = vsub.f32 %v334, %v458
    %v467 = vsub.f32 %v342, %v449
    %v468 = vsub.f32 %v350, %v449
    %v469 = vsub.f32 %v349, %v457
    %v470 = vsub.f32 %v351, %v456
    %v471 = vsub.f32 %v358, %v458
    %v472 = vsub.f32 %v359, %v449
    %v473 = vmul.f32 %v463, %v463
    %v474 = vmul.f32 %v464, %v464
    %v475 = vmul.f32 %v465, %v465
    %v476 = vmul.f32 %v466, %v466
    %v477 = vmul.f32 %v467, %v467
    %v478 = vmul.f32 %v468, %v468
    %v479 = vmul.f32 %v469, %v469
    %v480 = vmul.f32 %v470, %v470
    %v481 = vmul.f32 %v471, %v471
    %v482 = vmul.f32 %v472, %v472
    %v493 = vcombine.low %v473, %v474
    %v494 = vcombine.low %v475, %v476
    %v496 = vunpack.c.l.s4 1983009808
    %v497 = vunpack.c.0.s8 %v496
    %v498 = vlaneseq
    %v499 = vshrl.u32 %v498, 7
    %v500 = vsub.s32 %v497, %v499
    %v501 = vrot.slane %v493, %v500
    %v503 = vunpack.c.l.s4 1983009808
    %v504 = vunpack.c.0.s8 %v503
    %v505 = vlaneseq
    %v506 = vshrl.u32 %v505, 7
    %v507 = vsub.s32 %v504, %v506
    %v508 = vrot.slane %v494, %v507
    %v509 = vcombine.low %v501, %v508
    %v511 = vunpack.c.l.s4 1983009808
    %v512 = vunpack.c.0.s8 %v511
    %v513 = vlaneseq
    %v514 = vshrl.u32 %v513, 7
    %v515 = vsub.s32 %v512, %v514
    %v516 = vrot.slane %v477, %v515
    %v517 = vcombine.low %v478, %v479
    %v518 = vcombine.low %v480, %v481
    %v520 = vunpack.c.l.s4 1983009808
    %v521 = vunpack.c.0.s8 %v520
    %v522 = vlaneseq
    %v523 = vshrl.u32 %v522, 7
    %v524 = vsub.s32 %v521, %v523
    %v525 = vrot.slane %v517, %v524
    %v527 = vunpack.c.l.s4 1983009808
    %v528 = vunpack.c.0.s8 %v527
    %v529 = vlaneseq
    %v530 = vshrl.u32 %v529, 7
    %v531 = vsub.s32 %v528, %v530
    %v532 = vrot.slane %v518, %v531
    %v533 = vcombine.low %v525, %v532
    %v535 = vunpack.c.l.s4 1983009808
    %v536 = vunpack.c.0.s8 %v535
    %v537 = vlaneseq
    %v538 = vshrl.u32 %v537, 7
    %v539 = vsub.s32 %v536, %v538
    %v540 = vrot.slane %v482, %v539
    %v545 = vsel %vm424, %v509, 0.0
    %v546 = vsel %vm426, %v516, 0.0
    %v547 = vadd.f32 %v545, %v546
    %v548 = vsel %vm424, %v533, 0.0
    %v549 = vadd.f32 %v547, %v548
    %v550 = vsel %vm426, %v540, 0.0
    %v551 = vadd.f32 %v549, %v550
    %v552 = vrot.slane %v551, 4
    %v553 = vadd.f32 %v551, %v552
    %v554 = vrot.slane %v553, 2
    %v555 = vadd.f32 %v553, %v554
    %v556 = vrot.slane %v555, 1
    %v557 = vadd.f32 %v555, %v556
    %v558 = vmul.f32 %v557, %v439
    %v559 = vadd.f32 %v558, 1e-05
    %v560 = vrsqrt.pop %v559
    %v561 = vmul.f32 %v370, %v560
    %v562 = vmul.f32 %v440, %v561
    %v563 = vsub.f32 %v371, %v562
    %v564 = vlaneseq
    %v565 = vshrl.u32 %v564, 7
    %v566 = vsub.s32 0, %v565
    %v567 = vrot.slane %v561, %v566
    %v569 = vcombine.high %v567, %v567
    %v571 = vunpack.c.l.s4 1983009808
    %v572 = vunpack.c.0.s8 %v571
    %v573 = vlaneseq
    %v574 = vshrl.u32 %v573, 7
    %v575 = vsub.s32 %v572, %v574
    %v576 = vrot.slane %v567, %v575
    %v578 = vunpack.c.l.s4 1983009808
    %v579 = vunpack.c.0.s8 %v578
    %v580 = vlaneseq
    %v581 = vshrl.u32 %v580, 7
    %v582 = vsub.s32 %v579, %v581
    %v583 = vrot.slane %v569, %v582
    %v584 = vcombine.high %v576, %v576
    %v585 = vcombine.high %v583, %v583
    %v590 = vmul.f32 %v325, %v576
    %v591 = vmul.f32 %v333, %v584
    %v592 = vmul.f32 %v332, %v583
    %v593 = vmul.f32 %v334, %v585
    %v594 = vmul.f32 %v342, %v576
    %v595 = vmul.f32 %v350, %v576
    %v596 = vmul.f32 %v349, %v584
    %v597 = vmul.f32 %v351, %v583
    %v598 = vmul.f32 %v358, %v585
    %v599 = vmul.f32 %v359, %v576
    %v600 = vlaneseq
    %v601 = vshrl.u32 %v600, 7
    %v602 = vsub.s32 0, %v601
    %v603 = vrot.slane %v563, %v602
    %v605 = vcombine.high %v603, %v603
    %v607 = vunpack.c.l.s4 1983009808
    %v608 = vunpack.c.0.s8 %v607
    %v609 = vlaneseq
    %v610 = vshrl.u32 %v609, 7
    %v611 = vsub.s32 %v608, %v610
    %v612 = vrot.slane %v603, %v611
    %v614 = vunpack.c.l.s4 1983009808
    %v615 = vunpack.c.0.s8 %v614
    %v616 = vlaneseq
    %v617 = vshrl.u32 %v616, 7
    %v618 = vsub.s32 %v615, %v617
    %v619 = vrot.slane %v605, %v618
    %v620 = vcombine.high %v612, %v612
    %v621 = vcombine.high %v619, %v619
    %v626 = vadd.f32 %v590, %v612
    %v627 = vadd.f32 %v591, %v620
    %v628 = vadd.f32 %v592, %v619
    %v629 = vadd.f32 %v593, %v621
    %v630 = vadd.f32 %v594, %v612
    %v631 = vadd.f32 %v595, %v612
    %v632 = vadd.f32 %v596, %v620
    %v633 = vadd.f32 %v597, %v619
    %v634 = vadd.f32 %v598, %v621
    %v635 = vadd.f32 %v599, %v612
    %v636 = vmax.f32 %v626, 0.0
    %v637 = vmax.f32 %v627, 0.0
    %v638 = vmax.f32 %v628, 0.0
    %v639 = vmax.f32 %v629, 0.0
    %v640 = vmax.f32 %v630, 0.0
    %v641 = vmax.f32 %v631, 0.0
    %v642 = vmax.f32 %v632, 0.0
    %v643 = vmax.f32 %v633, 0.0
    %v644 = vmax.f32 %v634, 0.0
    %v645 = vmax.f32 %v635, 0.0
    %v646 = vld [vmem:[%s2] sm:$0xff]
    %v647 = vld [vmem:[%s2 + $0x8] sm:$0xff]
    %v648 = vld [vmem:[%s2 + $0x10] sm:$0xff]
    %v649 = vld [vmem:[%s2 + $0x18] sm:$0xff]
    %v650 = vld [vmem:[%s2 + $0x20] sm:$0xff]
    %v651 = vld [vmem:[%s2 + $0x28] sm:$0xff]
    %v652 = vld [vmem:[%s2 + $0x30] sm:$0xff]
    %v653 = vld [vmem:[%s2 + $0x38] sm:$0xff]
    %v654 = vld [vmem:[%s2 + $0x40] sm:$0xff]
    %v655 = vld [vmem:[%s2 + $0x48] sm:$0xff]
    %v656 = vld [vmem:[%s2 + $0x50] sm:$0xff]
    %v657 = vld [vmem:[%s2 + $0x58] sm:$0xff]
    %v658 = vld [vmem:[%s2 + $0x60] sm:$0xff]
    %v659 = vld [vmem:[%s2 + $0x68] sm:$0xff]
    %v660 = vld [vmem:[%s2 + $0x70] sm:$0xff]
    %v661 = vld [vmem:[%s2 + $0x78] sm:$0xff]
    %v662 = vld [vmem:[%s2 + $0x80] sm:$0xff]
    %v663 = vld [vmem:[%s2 + $0x88] sm:$0xff]
    %v664 = vld [vmem:[%s2 + $0x90] sm:$0xff]
    %v665 = vld [vmem:[%s2 + $0x98] sm:$0xff]
    %v672 = vcombine.low %v636, %v637
    %v674 = vunpack.c.l.s4 1983009808
    %v675 = vunpack.c.0.s8 %v674
    %v676 = vlaneseq
    %v677 = vshrl.u32 %v676, 7
    %v678 = vsub.s32 %v675, %v677
    %v679 = vrot.slane %v672, %v678
    %v681 = vunpack.c.l.s4 1983009808
    %v682 = vunpack.c.0.s8 %v681
    %v683 = vlaneseq
    %v684 = vshrl.u32 %v683, 7
    %v685 = vsub.s32 %v682, %v684
    %v686 = vrot.slane %v638, %v685
    %v687 = vcombine.low %v679, %v686
    %v688 = vcombine.low %v641, %v642
    %v690 = vunpack.c.l.s4 1983009808
    %v691 = vunpack.c.0.s8 %v690
    %v692 = vlaneseq
    %v693 = vshrl.u32 %v692, 7
    %v694 = vsub.s32 %v691, %v693
    %v695 = vrot.slane %v688, %v694
    %v697 = vunpack.c.l.s4 1983009808
    %v698 = vunpack.c.0.s8 %v697
    %v699 = vlaneseq
    %v700 = vshrl.u32 %v699, 7
    %v701 = vsub.s32 %v698, %v700
    %v702 = vrot.slane %v643, %v701
    %v703 = vcombine.low %v695, %v702
    %v708 = vcombine.low %v638, %v639
    %v710 = vunpack.c.l.s4 1983009808
    %v711 = vunpack.c.0.s8 %v710
    %v712 = vlaneseq
    %v713 = vshrl.u32 %v712, 7
    %v714 = vsub.s32 %v711, %v713
    %v715 = vrot.slane %v708, %v714
    %v716 = vcombine.low %v679, %v715
    %v717 = vcombine.low %v643, %v644
    %v719 = vunpack.c.l.s4 1983009808
    %v720 = vunpack.c.0.s8 %v719
    %v721 = vlaneseq
    %v722 = vshrl.u32 %v721, 7
    %v723 = vsub.s32 %v720, %v722
    %v724 = vrot.slane %v717, %v723
    %v725 = vcombine.low %v695, %v724
    %v726 = vrot.slane %v716, 1
    %v727 = vrot.slane %v725, 1
    %728 = vrot.lane.b32.xlu0 %v726, 32
    %v729 = vpop.permute.xlu0 %728
    %730 = vrot.lane.b32.xlu0 %v727, 32
    %v731 = vpop.permute.xlu0 %730
    %v734 = vcombine.low %v637, %v638
    %v736 = vunpack.c.l.s4 1983009808
    %v737 = vunpack.c.0.s8 %v736
    %v738 = vlaneseq
    %v739 = vshrl.u32 %v738, 7
    %v740 = vsub.s32 %v737, %v739
    %v741 = vrot.slane %v734, %v740
    %v743 = vunpack.c.l.s4 1983009808
    %v744 = vunpack.c.0.s8 %v743
    %v745 = vlaneseq
    %v746 = vshrl.u32 %v745, 7
    %v747 = vsub.s32 %v744, %v746
    %v748 = vrot.slane %v639, %v747
    %v749 = vcombine.low %v741, %v748
    %v750 = vcombine.low %v642, %v643
    %v752 = vunpack.c.l.s4 1983009808
    %v753 = vunpack.c.0.s8 %v752
    %v754 = vlaneseq
    %v755 = vshrl.u32 %v754, 7
    %v756 = vsub.s32 %v753, %v755
    %v757 = vrot.slane %v750, %v756
    %v759 = vunpack.c.l.s4 1983009808
    %v760 = vunpack.c.0.s8 %v759
    %v761 = vlaneseq
    %v762 = vshrl.u32 %v761, 7
    %v763 = vsub.s32 %v760, %v762
    %v764 = vrot.slane %v644, %v763
    %v765 = vcombine.low %v757, %v764
    %766 = vrot.lane.b32.xlu0 %v749, 64
    %v767 = vpop.permute.xlu0 %766
    %768 = vrot.lane.b32.xlu0 %v765, 64
    %v769 = vpop.permute.xlu0 %768
    %v774 = vcombine.low %v639, %v640
    %v776 = vunpack.c.l.s4 1983009808
    %v777 = vunpack.c.0.s8 %v776
    %v778 = vlaneseq
    %v779 = vshrl.u32 %v778, 7
    %v780 = vsub.s32 %v777, %v779
    %v781 = vrot.slane %v774, %v780
    %v782 = vcombine.low %v741, %v781
    %v783 = vcombine.low %v644, %v645
    %v785 = vunpack.c.l.s4 1983009808
    %v786 = vunpack.c.0.s8 %v785
    %v787 = vlaneseq
    %v788 = vshrl.u32 %v787, 7
    %v789 = vsub.s32 %v786, %v788
    %v790 = vrot.slane %v783, %v789
    %v791 = vcombine.low %v757, %v790
    %v792 = vrot.slane %v782, 1
    %v793 = vrot.slane %v791, 1
    %794 = vrot.lane.b32.xlu0 %v792, 96
    %v795 = vpop.permute.xlu0 %794
    %796 = vrot.lane.b32.xlu0 %v793, 96
    %v797 = vpop.permute.xlu0 %796
    %v801 = vunpack.c.l.s4 1983009808
    %v802 = vunpack.c.0.s8 %v801
    %v803 = vlaneseq
    %v804 = vshrl.u32 %v803, 7
    %v805 = vsub.s32 %v802, %v804
    %v806 = vrot.slane %v640, %v805
    %v807 = vcombine.low %v715, %v806
    %v809 = vunpack.c.l.s4 1983009808
    %v810 = vunpack.c.0.s8 %v809
    %v811 = vlaneseq
    %v812 = vshrl.u32 %v811, 7
    %v813 = vsub.s32 %v810, %v812
    %v814 = vrot.slane %v645, %v813
    %v815 = vcombine.low %v724, %v814
    %v816 = vsel %vm424, %v687, %v729
    %v817 = vsel %vm424, %v703, %v731
    %vm818 = vcmask 523264
    %v819 = vsel %vm818, %v816, %v767
    %v820 = vsel %vm818, %v817, %v769
    %vm821 = vcmask 785408
    %v822 = vsel %vm821, %v819, %v795
    %v823 = vsel %vm821, %v820, %v797
    %v826 = vcombine.low %v822, %v807
    %v827 = vcombine.high %v822, %v807
    %v829 = vunpack.c.l.s4 1983009808
    %v830 = vunpack.c.0.s8 %v829
    %v831 = vlaneseq
    %v832 = vshrl.u32 %v831, 7
    %v833 = vsub.s32 %v830, %v832
    %v834 = vrot.slane %v826, %v833
    %v836 = vunpack.c.l.s4 1983009808
    %v837 = vunpack.c.0.s8 %v836
    %v838 = vlaneseq
    %v839 = vshrl.u32 %v838, 7
    %v840 = vsub.s32 %v837, %v839
    %v841 = vrot.slane %v827, %v840
    %v842 = vcombine.high %v834, %v834
    %v843 = vcombine.low %v823, %v815
    %v844 = vcombine.high %v823, %v815
    %v846 = vunpack.c.l.s4 1983009808
    %v847 = vunpack.c.0.s8 %v846
    %v848 = vlaneseq
    %v849 = vshrl.u32 %v848, 7
    %v850 = vsub.s32 %v847, %v849
    %v851 = vrot.slane %v843, %v850
    %v853 = vunpack.c.l.s4 1983009808
    %v854 = vunpack.c.0.s8 %v853
    %v855 = vlaneseq
    %v856 = vshrl.u32 %v855, 7
    %v857 = vsub.s32 %v854, %v856
    %v858 = vrot.slane %v844, %v857
    %v859 = vcombine.high %v851, %v851
    %v860 = vcombine.low %v834, %v842
    %v861 = vcombine.low %v841, %v851
    %v863 = vunpack.c.l.s4 1983009808
    %v864 = vunpack.c.0.s8 %v863
    %v865 = vlaneseq
    %v866 = vshrl.u32 %v865, 7
    %v867 = vsub.s32 %v864, %v866
    %v868 = vrot.slane %v860, %v867
    %v870 = vunpack.c.l.s4 1983009808
    %v871 = vunpack.c.0.s8 %v870
    %v872 = vlaneseq
    %v873 = vshrl.u32 %v872, 7
    %v874 = vsub.s32 %v871, %v873
    %v875 = vrot.slane %v861, %v874
    %v876 = vcombine.low %v868, %v875
    %v877 = vcombine.high %v868, %v875
    %v878 = vcombine.low %v859, %v858
    %v880 = vunpack.c.l.s4 1983009808
    %v881 = vunpack.c.0.s8 %v880
    %v882 = vlaneseq
    %v883 = vshrl.u32 %v882, 7
    %v884 = vsub.s32 %v881, %v883
    %v885 = vrot.slane %v878, %v884
    %v886 = vcombine.high %v885, %v885
    %v889 = vsel %vm424, %v877, 0
    %v891 = vsel %vm424, %v886, 0
    %893 = vmatprep.subr.mxu0 0.0
    %894 = vmatpush1.msra.mxu0 %v646
    %895 = vmatprep.subr.mxu0 0.0
    %896 = vmatpush1.msra.mxu0 %v647
    %897 = vmatprep.subr.mxu0 0.0
    %898 = vmatpush1.msra.mxu0 %v648
    %899 = vmatprep.subr.mxu0 0.0
    %900 = vmatpush1.msra.mxu0 %v649
    %901 = vmatprep.subr.mxu0 0.0
    %902 = vmatpush1.msra.mxu0 %v650
    %903 = vmatprep.subr.mxu0 0.0
    %904 = vmatpush1.msra.mxu0 %v651
    %905 = vmatprep.subr.mxu0 0.0
    %906 = vmatpush1.msra.mxu0 %v652
    %907 = vmatprep.subr.mxu0 0.0
    %908 = vmatpush1.msra.mxu0 %v653
    %909 = vmatprep.subr.mxu0 0.0
    %910 = vmatpush1.msra.mxu0 %v654
    %911 = vmatprep.subr.mxu0 0.0
    %912 = vmatpush1.msra.mxu0 %v655
    %913 = vmatprep.subr.mxu0 0.0
    %914 = vmatpush1.msra.mxu0 %v656
    %915 = vmatprep.subr.mxu0 0.0
    %916 = vmatpush1.msra.mxu0 %v657
    %917 = vmatprep.subr.mxu0 0.0
    %918 = vmatpush1.msra.mxu0 %v658
    %919 = vmatprep.subr.mxu0 0.0
    %920 = vmatpush1.msra.mxu0 %v659
    %921 = vmatprep.subr.mxu0 0.0
    %922 = vmatpush1.msra.mxu0 %v660
    %923 = vmatprep.subr.mxu0 0.0
    %924 = vmatpush1.msra.mxu0 %v661
    %925 = vmatprep.subr.mxu0 0.0
    %926 = vmatpush1.msra.mxu0 %v662
    %927 = vmatprep.subr.mxu0 0.0
    %928 = vmatpush1.msra.mxu0 %v663
    %929 = vmatprep.subr.mxu0 0.0
    %930 = vmatpush1.msra.mxu0 %v664
    %931 = vmatprep.subr.mxu0 0.0
    %932 = vmatpush1.msra.mxu0 %v665
    %933 = vmatprep.subr.mxu0 0.0
    %934 = vmatpush1.msra.mxu0 0.0
    %935 = vmatprep.subr.mxu0 0.0
    %936 = vmatpush1.msra.mxu0 0.0
    %937 = vmatprep.subr.mxu0 0.0
    %938 = vmatpush1.msra.mxu0 0.0
    %939 = vmatprep.subr.mxu0 0.0
    %940 = vmatpush1.msra.mxu0 0.0
    %941 = vmatprep.subr.mxu0 0.0
    %942 = vmatpush1.msra.mxu0 0.0
    %943 = vmatprep.subr.mxu0 0.0
    %944 = vmatpush1.msra.mxu0 0.0
    %945 = vmatprep.subr.mxu0 0.0
    %946 = vmatpush1.msra.mxu0 0.0
    %947 = vmatprep.subr.mxu0 0.0
    %948 = vmatpush1.msra.mxu0 0.0
    %949 = vmatprep.subr.mxu0 0.0
    %950 = vmatpush1.msra.mxu0 0.0
    %951 = vmatprep.subr.mxu0 0.0
    %952 = vmatpush1.msra.mxu0 0.0
    %953 = vmatprep.subr.mxu0 0.0
    %954 = vmatpush1.msra.mxu0 0.0
    %955 = vmatprep.subr.mxu0 0.0
    %956 = vmatpush1.msra.mxu0 0.0
    %957 = vmatprep.mubr.f32.mxu0 %v889
    %958 = vmatmul.mubr.f32.gmra.mrb[0].mxu0 %v876
    %v959 = vpop.f32.mrb[0].mxu0
    %v960 = vadd.f32 0.0, %v959
    %v961 = vpop.f32.mrb[0].mxu0
    %962 = vmatprep.mubr.f32.mxu0 %v891
    %963 = vmatmul.mubr.f32.gmra.mrb[0].mxu0 %v885
    %v964 = vpop.f32.mrb[0].mxu0
    %v965 = vadd.f32 0.0, %v964
    %v966 = vpop.f32.mrb[0].mxu0
    %967 = vdwg.mxu0
    %v970 = vcombine.high %v960, %v960
    %v972 = vunpack.c.l.s4 1983009808
    %v973 = vunpack.c.0.s8 %v972
    %v974 = vlaneseq
    %v975 = vshrl.u32 %v974, 7
    %v976 = vsub.s32 %v973, %v975
    %v977 = vrot.slane %v960, %v976
    %v979 = vunpack.c.l.s4 1983009808
    %v980 = vunpack.c.0.s8 %v979
    %v981 = vlaneseq
    %v982 = vshrl.u32 %v981, 7
    %v983 = vsub.s32 %v980, %v982
    %v984 = vrot.slane %v970, %v983
    %v985 = vcombine.high %v977, %v977
    %v986 = vcombine.high %v984, %v984
    %v988 = vunpack.c.l.s4 1983009808
    %v989 = vunpack.c.0.s8 %v988
    %v990 = vlaneseq
    %v991 = vshrl.u32 %v990, 7
    %v992 = vsub.s32 %v989, %v991
    %v993 = vrot.slane %v965, %v992
    %v994 = vcombine.high %v993, %v993
    %v1001 = vld [vmem:[%s5 + $0x1] sm:$0x1]
    %v1002 = vld [vmem:[%s5 + $0x6] sm:$0x1]
    %v1003 = vcombine.low %v977, %v985
    %v1005 = vunpack.c.l.s4 1983009808
    %v1006 = vunpack.c.0.s8 %v1005
    %v1007 = vlaneseq
    %v1008 = vshrl.u32 %v1007, 7
    %v1009 = vsub.s32 %v1006, %v1008
    %v1010 = vrot.slane %v1003, %v1009
    %v1012 = vunpack.c.l.s4 1983009808
    %v1013 = vunpack.c.0.s8 %v1012
    %v1014 = vlaneseq
    %v1015 = vshrl.u32 %v1014, 7
    %v1016 = vsub.s32 %v1013, %v1015
    %v1017 = vrot.slane %v984, %v1016
    %v1018 = vcombine.low %v1010, %v1017
    %v1019 = vcombine.low %v986, %v993
    %v1021 = vunpack.c.l.s4 1983009808
    %v1022 = vunpack.c.0.s8 %v1021
    %v1023 = vlaneseq
    %v1024 = vshrl.u32 %v1023, 7
    %v1025 = vsub.s32 %v1022, %v1024
    %v1026 = vrot.slane %v1019, %v1025
    %v1028 = vunpack.c.l.s4 1983009808
    %v1029 = vunpack.c.0.s8 %v1028
    %v1030 = vlaneseq
    %v1031 = vshrl.u32 %v1030, 7
    %v1032 = vsub.s32 %v1029, %v1031
    %v1033 = vrot.slane %v994, %v1032
    %v1034 = vcombine.low %v1026, %v1033
    %vm1037 = vcmask 259072
    %v1038 = vsel %vm1037, %v1018, 0.0
    %v1039 = vsel %vm1037, %v1034, 0.0
    %v1040 = vadd.f32 %v1038, %v1039
    %v1041 = vrot.slane %v1040, 4
    %v1042 = vadd.f32 %v1040, %v1041
    %v1043 = vrot.slane %v1042, 2
    %v1044 = vadd.f32 %v1042, %v1043
    %v1045 = vrot.slane %v1044, 1
    %v1046 = vadd.f32 %v1044, %v1045
    %v1047 = vrcp.pop 12.0
    %v1048 = vmul.f32 %v1046, %v1047
    %v1050 = vcombine.high %v1048, %v1048
    %v1052 = vunpack.c.l.s4 1983009808
    %v1053 = vunpack.c.0.s8 %v1052
    %v1054 = vlaneseq
    %v1055 = vshrl.u32 %v1054, 7
    %v1056 = vsub.s32 %v1053, %v1055
    %v1057 = vrot.slane %v1048, %v1056
    %v1059 = vunpack.c.l.s4 1983009808
    %v1060 = vunpack.c.0.s8 %v1059
    %v1061 = vlaneseq
    %v1062 = vshrl.u32 %v1061, 7
    %v1063 = vsub.s32 %v1060, %v1062
    %v1064 = vrot.slane %v1050, %v1063
    %v1065 = vcombine.high %v1057, %v1057
    %v1069 = vsub.f32 %v977, %v1057
    %v1070 = vsub.f32 %v985, %v1065
    %v1071 = vsub.f32 %v984, %v1064
    %v1072 = vsub.f32 %v986, %v1057
    %v1073 = vsub.f32 %v993, %v1065
    %v1074 = vsub.f32 %v994, %v1064
    %v1075 = vmul.f32 %v1069, %v1069
    %v1076 = vmul.f32 %v1070, %v1070
    %v1077 = vmul.f32 %v1071, %v1071
    %v1078 = vmul.f32 %v1072, %v1072
    %v1079 = vmul.f32 %v1073, %v1073
    %v1080 = vmul.f32 %v1074, %v1074
    %v1087 = vcombine.low %v1075, %v1076
    %v1089 = vunpack.c.l.s4 1983009808
    %v1090 = vunpack.c.0.s8 %v1089
    %v1091 = vlaneseq
    %v1092 = vshrl.u32 %v1091, 7
    %v1093 = vsub.s32 %v1090, %v1092
    %v1094 = vrot.slane %v1087, %v1093
    %v1096 = vunpack.c.l.s4 1983009808
    %v1097 = vunpack.c.0.s8 %v1096
    %v1098 = vlaneseq
    %v1099 = vshrl.u32 %v1098, 7
    %v1100 = vsub.s32 %v1097, %v1099
    %v1101 = vrot.slane %v1077, %v1100
    %v1102 = vcombine.low %v1094, %v1101
    %v1103 = vcombine.low %v1078, %v1079
    %v1105 = vunpack.c.l.s4 1983009808
    %v1106 = vunpack.c.0.s8 %v1105
    %v1107 = vlaneseq
    %v1108 = vshrl.u32 %v1107, 7
    %v1109 = vsub.s32 %v1106, %v1108
    %v1110 = vrot.slane %v1103, %v1109
    %v1112 = vunpack.c.l.s4 1983009808
    %v1113 = vunpack.c.0.s8 %v1112
    %v1114 = vlaneseq
    %v1115 = vshrl.u32 %v1114, 7
    %v1116 = vsub.s32 %v1113, %v1115
    %v1117 = vrot.slane %v1080, %v1116
    %v1118 = vcombine.low %v1110, %v1117
    %v1121 = vsel %vm1037, %v1102, 0.0
    %v1122 = vsel %vm1037, %v1118, 0.0
    %v1123 = vadd.f32 %v1121, %v1122
    %v1124 = vrot.slane %v1123, 4
    %v1125 = vadd.f32 %v1123, %v1124
    %v1126 = vrot.slane %v1125, 2
    %v1127 = vadd.f32 %v1125, %v1126
    %v1128 = vrot.slane %v1127, 1
    %v1129 = vadd.f32 %v1127, %v1128
    %v1130 = vmul.f32 %v1129, %v1047
    %v1131 = vadd.f32 %v1130, 1e-05
    %v1132 = vrsqrt.pop %v1131
    %v1133 = vmul.f32 %v1001, %v1132
    %v1134 = vmul.f32 %v1048, %v1133
    %v1135 = vsub.f32 %v1002, %v1134
    %v1136 = vlaneseq
    %v1137 = vshrl.u32 %v1136, 7
    %v1138 = vsub.s32 0, %v1137
    %v1139 = vrot.slane %v1133, %v1138
    %v1141 = vcombine.high %v1139, %v1139
    %v1143 = vunpack.c.l.s4 1983009808
    %v1144 = vunpack.c.0.s8 %v1143
    %v1145 = vlaneseq
    %v1146 = vshrl.u32 %v1145, 7
    %v1147 = vsub.s32 %v1144, %v1146
    %v1148 = vrot.slane %v1139, %v1147
    %v1150 = vunpack.c.l.s4 1983009808
    %v1151 = vunpack.c.0.s8 %v1150
    %v1152 = vlaneseq
    %v1153 = vshrl.u32 %v1152, 7
    %v1154 = vsub.s32 %v1151, %v1153
    %v1155 = vrot.slane %v1141, %v1154
    %v1156 = vcombine.high %v1148, %v1148
    %v1160 = vmul.f32 %v977, %v1148
    %v1161 = vmul.f32 %v985, %v1156
    %v1162 = vmul.f32 %v984, %v1155
    %v1163 = vmul.f32 %v986, %v1148
    %v1164 = vmul.f32 %v993, %v1156
    %v1165 = vmul.f32 %v994, %v1155
    %v1166 = vlaneseq
    %v1167 = vshrl.u32 %v1166, 7
    %v1168 = vsub.s32 0, %v1167
    %v1169 = vrot.slane %v1135, %v1168
    %v1171 = vcombine.high %v1169, %v1169
    %v1173 = vunpack.c.l.s4 1983009808
    %v1174 = vunpack.c.0.s8 %v1173
    %v1175 = vlaneseq
    %v1176 = vshrl.u32 %v1175, 7
    %v1177 = vsub.s32 %v1174, %v1176
    %v1178 = vrot.slane %v1169, %v1177
    %v1180 = vunpack.c.l.s4 1983009808
    %v1181 = vunpack.c.0.s8 %v1180
    %v1182 = vlaneseq
    %v1183 = vshrl.u32 %v1182, 7
    %v1184 = vsub.s32 %v1181, %v1183
    %v1185 = vrot.slane %v1171, %v1184
    %v1186 = vcombine.high %v1178, %v1178
    %v1190 = vadd.f32 %v1160, %v1178
    %v1191 = vadd.f32 %v1161, %v1186
    %v1192 = vadd.f32 %v1162, %v1185
    %v1193 = vadd.f32 %v1163, %v1178
    %v1194 = vadd.f32 %v1164, %v1186
    %v1195 = vadd.f32 %v1165, %v1185
    %v1196 = vmax.f32 %v1190, 0.0
    %v1197 = vmax.f32 %v1191, 0.0
    %v1198 = vmax.f32 %v1192, 0.0
    %v1199 = vmax.f32 %v1193, 0.0
    %v1200 = vmax.f32 %v1194, 0.0
    %v1201 = vmax.f32 %v1195, 0.0
    %vm1208 = vcmask 1040384
    %vm1209 = vcmask 1042434
    %vm1210 = vmor %vm1208, %vm1209
    %vm1211 = vcmask 1044484
    %vm1212 = vmor %vm1210, %vm1211
    %vm1213 = vcmask 1046534
    %vm1214 = vmor %vm1212, %vm1213
    %v1215 = vrot.slane %v1196, 7
    %v1216 = vrot.slane %v1215, 2
    %v1217 = vrot.slane %v1197, 7
    %v1218 = vsel %vm1214, %v1216, %v1217
    %v1219 = vrot.slane %v1217, 2
    %v1220 = vrot.slane %v1198, 7
    %v1221 = vsel %vm1214, %v1219, %v1220
    %v1222 = vrot.slane %v1199, 7
    %v1223 = vrot.slane %v1222, 2
    %v1224 = vrot.slane %v1200, 7
    %v1225 = vsel %vm1214, %v1223, %v1224
    %v1226 = vrot.slane %v1224, 2
    %v1227 = vrot.slane %v1201, 7
    %v1228 = vsel %vm1214, %v1226, %v1227
    %v1233 = vmax.f32 %v1196, %v1218
    %v1234 = vmax.f32 %v1197, %v1221
    %v1235 = vmax.f32 %v1199, %v1225
    %v1236 = vmax.f32 %v1200, %v1228
    %v1237 = vmax.f32 %v1233, %v1197
    %v1238 = vmax.f32 %v1234, %v1198
    %v1239 = vmax.f32 %v1235, %v1200
    %v1240 = vmax.f32 %v1236, %v1201
    %v1243 = vlaneseq
    %v1244 = vshrl.u32 %v1243, 7
    %v1245 = vsub.s32 0, %v1244
    %v1246 = vrot.slane %v1238, %v1245
    %v1247 = vlaneseq
    %v1248 = vshrl.u32 %v1247, 7
    %v1249 = vsub.s32 0, %v1248
    %v1250 = vrot.slane %v1240, %v1249
    %v1253 = vsel %vm1208, %v1237, %v1246
    %v1254 = vsel %vm1208, %v1239, %v1250
    %v1255 = vld [vmem:[%s5 + $0x2] sm:$0x1]
    %v1256 = vld [vmem:[%s5 + $0x7] sm:$0x1]
    %v1257 = vsel %vm426, %v1253, 0.0
    %v1258 = vsel %vm426, %v1254, 0.0
    %v1259 = vadd.f32 %v1257, %v1258
    %v1260 = vrot.slane %v1259, 4
    %v1261 = vadd.f32 %v1259, %v1260
    %v1262 = vrot.slane %v1261, 2
    %v1263 = vadd.f32 %v1261, %v1262
    %v1264 = vrot.slane %v1263, 1
    %v1265 = vadd.f32 %v1263, %v1264
    %v1266 = vrcp.pop 4.0
    %v1267 = vmul.f32 %v1265, %v1266
    %v1268 = vsub.f32 %v1253, %v1267
    %v1269 = vsub.f32 %v1254, %v1267
    %v1270 = vmul.f32 %v1268, %v1268
    %v1271 = vmul.f32 %v1269, %v1269
    %v1272 = vsel %vm426, %v1270, 0.0
    %v1273 = vsel %vm426, %v1271, 0.0
    %v1274 = vadd.f32 %v1272, %v1273
    %v1275 = vrot.slane %v1274, 4
    %v1276 = vadd.f32 %v1274, %v1275
    %v1277 = vrot.slane %v1276, 2
    %v1278 = vadd.f32 %v1276, %v1277
    %v1279 = vrot.slane %v1278, 1
    %v1280 = vadd.f32 %v1278, %v1279
    %v1281 = vmul.f32 %v1280, %v1266
    %v1282 = vadd.f32 %v1281, 1e-05
    %v1283 = vrsqrt.pop %v1282
    %v1284 = vmul.f32 %v1255, %v1283
    %v1285 = vmul.f32 %v1267, %v1284
    %v1286 = vsub.f32 %v1256, %v1285
    %v1287 = vlaneseq
    %v1288 = vshrl.u32 %v1287, 7
    %v1289 = vsub.s32 0, %v1288
    %v1290 = vrot.slane %v1284, %v1289
    %v1291 = vmul.f32 %v1253, %v1290
    %v1292 = vmul.f32 %v1254, %v1290
    %v1293 = vlaneseq
    %v1294 = vshrl.u32 %v1293, 7
    %v1295 = vsub.s32 0, %v1294
    %v1296 = vrot.slane %v1286, %v1295
    %v1297 = vadd.f32 %v1291, %v1296
    %v1298 = vadd.f32 %v1292, %v1296
    %v1299 = vmax.f32 %v1297, 0.0
    %v1300 = vmax.f32 %v1298, 0.0
    %1301 = vst.msk [vmem:[#allocation2] sm:$0x3f] %vm1037, 0.0
    %1302 = vst.msk [vmem:[#allocation2 + $0x8] sm:$0x3f] %vm1037, 0.0
    %1303 = vst.msk [vmem:[#allocation2 + $0x2] sm:$0x3] %vm426, %v1299
    %1304 = vst.msk [vmem:[#allocation2 + $0xa] sm:$0x3] %vm426, %v1300
    %v1305 = vld [vmem:[#allocation2] sm:$0x3f]
    %v1306 = vld [vmem:[#allocation2 + $0x8] sm:$0x3f]
    %v1307 = vld [vmem:[%s3] sm:$0xff]
    %v1308 = vld [vmem:[%s3 + $0x8] sm:$0xff]
    %v1309 = vld [vmem:[%s3 + $0x10] sm:$0xff]
    %v1310 = vld [vmem:[%s3 + $0x18] sm:$0xff]
    %v1311 = vld [vmem:[%s3 + $0x20] sm:$0xff]
    %v1312 = vld [vmem:[%s3 + $0x28] sm:$0xff]
    %v1313 = vld [vmem:[%s3 + $0x30] sm:$0xff]
    %v1314 = vld [vmem:[%s3 + $0x38] sm:$0xff]
    %v1315 = vld [vmem:[%s3 + $0x40] sm:$0xff]
    %v1316 = vld [vmem:[%s3 + $0x48] sm:$0xff]
    %v1317 = vld [vmem:[%s3 + $0x50] sm:$0xff]
    %v1318 = vld [vmem:[%s3 + $0x58] sm:$0xff]
    %v1321 = vrot.slane %v1305, 1
    %v1322 = vrot.slane %v1306, 1
    %1323 = vrot.lane.b32.xlu0 %v1321, 32
    %v1324 = vpop.permute.xlu0 %1323
    %1325 = vrot.lane.b32.xlu0 %v1322, 32
    %v1326 = vpop.permute.xlu0 %1325
    %v1329 = vrot.slane %v1305, 2
    %v1330 = vrot.slane %v1306, 2
    %1331 = vrot.lane.b32.xlu0 %v1329, 64
    %v1332 = vpop.permute.xlu0 %1331
    %1333 = vrot.lane.b32.xlu0 %v1330, 64
    %v1334 = vpop.permute.xlu0 %1333
    %v1337 = vsel %vm424, %v1305, %v1324
    %v1338 = vsel %vm424, %v1306, %v1326
    %v1339 = vsel %vm818, %v1337, %v1332
    %v1340 = vsel %vm818, %v1338, %v1334
    %v1343 = vcombine.low %v1339, %v1340
    %v1344 = vsel %vm821, %v1343, 0
    %1346 = vmatprep.subr.mxu0 0.0
    %1347 = vmatpush1.msra.mxu0 %v1307
    %1348 = vmatprep.subr.mxu0 0.0
    %1349 = vmatpush1.msra.mxu0 %v1308
    %1350 = vmatprep.subr.mxu0 0.0
    %1351 = vmatpush1.msra.mxu0 %v1309
    %1352 = vmatprep.subr.mxu0 0.0
    %1353 = vmatpush1.msra.mxu0 %v1310
    %1354 = vmatprep.subr.mxu0 0.0
    %1355 = vmatpush1.msra.mxu0 %v1311
    %1356 = vmatprep.subr.mxu0 0.0
    %1357 = vmatpush1.msra.mxu0 %v1312
    %1358 = vmatprep.subr.mxu0 0.0
    %1359 = vmatpush1.msra.mxu0 %v1313
    %1360 = vmatprep.subr.mxu0 0.0
    %1361 = vmatpush1.msra.mxu0 %v1314
    %1362 = vmatprep.subr.mxu0 0.0
    %1363 = vmatpush1.msra.mxu0 %v1315
    %1364 = vmatprep.subr.mxu0 0.0
    %1365 = vmatpush1.msra.mxu0 %v1316
    %1366 = vmatprep.subr.mxu0 0.0
    %1367 = vmatpush1.msra.mxu0 %v1317
    %1368 = vmatprep.subr.mxu0 0.0
    %1369 = vmatpush1.msra.mxu0 %v1318
    %1370 = vmatprep.subr.mxu0 0.0
    %1371 = vmatpush1.msra.mxu0 0.0
    %1372 = vmatprep.subr.mxu0 0.0
    %1373 = vmatpush1.msra.mxu0 0.0
    %1374 = vmatprep.subr.mxu0 0.0
    %1375 = vmatpush1.msra.mxu0 0.0
    %1376 = vmatprep.subr.mxu0 0.0
    %1377 = vmatpush1.msra.mxu0 0.0
    %1378 = vmatprep.subr.mxu0 0.0
    %1379 = vmatpush1.msra.mxu0 0.0
    %1380 = vmatprep.subr.mxu0 0.0
    %1381 = vmatpush1.msra.mxu0 0.0
    %1382 = vmatprep.subr.mxu0 0.0
    %1383 = vmatpush1.msra.mxu0 0.0
    %1384 = vmatprep.subr.mxu0 0.0
    %1385 = vmatpush1.msra.mxu0 0.0
    %1386 = vmatprep.subr.mxu0 0.0
    %1387 = vmatpush1.msra.mxu0 0.0
    %1388 = vmatprep.subr.mxu0 0.0
    %1389 = vmatpush1.msra.mxu0 0.0
    %1390 = vmatprep.subr.mxu0 0.0
    %1391 = vmatpush1.msra.mxu0 0.0
    %1392 = vmatprep.subr.mxu0 0.0
    %1393 = vmatpush1.msra.mxu0 0.0
    %1394 = vmatprep.subr.mxu0 0.0
    %1395 = vmatpush1.msra.mxu0 0.0
    %1396 = vmatprep.subr.mxu0 0.0
    %1397 = vmatpush1.msra.mxu0 0.0
    %1398 = vmatprep.subr.mxu0 0.0
    %1399 = vmatpush1.msra.mxu0 0.0
    %1400 = vmatprep.subr.mxu0 0.0
    %1401 = vmatpush1.msra.mxu0 0.0
    %1402 = vmatprep.subr.mxu0 0.0
    %1403 = vmatpush1.msra.mxu0 0.0
    %1404 = vmatprep.subr.mxu0 0.0
    %1405 = vmatpush1.msra.mxu0 0.0
    %1406 = vmatprep.subr.mxu0 0.0
    %1407 = vmatpush1.msra.mxu0 0.0
    %1408 = vmatprep.subr.mxu0 0.0
    %1409 = vmatpush1.msra.mxu0 0.0
    %1410 = vmatprep.mubr.f32.mxu0 0.0
    %1411 = vmatmul.mubr.f32.gmra.mrb[0].mxu0 %v1344
    %v1412 = vpop.f32.mrb[0].mxu0
    %v1413 = vadd.f32 0.0, %v1412
    %v1414 = vpop.f32.mrb[0].mxu0
    %1415 = vdwg.mxu0
    %v1417 = vcombine.high %v1413, %v1413
    %v1419 = vld [vmem:[%s5 + $0x3] sm:$0x1]
    %v1420 = vld [vmem:[%s5 + $0x8] sm:$0x1]
    %vm1421 = vcmask 519168
    %v1422 = vsel %vm1421, %v1413, 0.0
    %v1423 = vsel %vm1421, %v1417, 0.0
    %v1424 = vadd.f32 %v1422, %v1423
    %v1425 = vrot.slane %v1424, 4
    %v1426 = vadd.f32 %v1424, %v1425
    %v1427 = vrot.slane %v1426, 2
    %v1428 = vadd.f32 %v1426, %v1427
    %v1429 = vrot.slane %v1428, 1
    %v1430 = vadd.f32 %v1428, %v1429
    %v1431 = vrcp.pop 8.0
    %v1432 = vmul.f32 %v1430, %v1431
    %v1433 = vsub.f32 %v1413, %v1432
    %v1434 = vsub.f32 %v1417, %v1432
    %v1435 = vmul.f32 %v1433, %v1433
    %v1436 = vmul.f32 %v1434, %v1434
    %v1437 = vsel %vm1421, %v1435, 0.0
    %v1438 = vsel %vm1421, %v1436, 0.0
    %v1439 = vadd.f32 %v1437, %v1438
    %v1440 = vrot.slane %v1439, 4
    %v1441 = vadd.f32 %v1439, %v1440
    %v1442 = vrot.slane %v1441, 2
    %v1443 = vadd.f32 %v1441, %v1442
    %v1444 = vrot.slane %v1443, 1
    %v1445 = vadd.f32 %v1443, %v1444
    %v1446 = vmul.f32 %v1445, %v1431
    %v1447 = vadd.f32 %v1446, 1e-05
    %v1448 = vrsqrt.pop %v1447
    %v1449 = vmul.f32 %v1419, %v1448
    %v1450 = vmul.f32 %v1432, %v1449
    %v1451 = vsub.f32 %v1420, %v1450
    %v1452 = vlaneseq
    %v1453 = vshrl.u32 %v1452, 7
    %v1454 = vsub.s32 0, %v1453
    %v1455 = vrot.slane %v1449, %v1454
    %v1456 = vmul.f32 %v1413, %v1455
    %v1457 = vmul.f32 %v1417, %v1455
    %v1458 = vlaneseq
    %v1459 = vshrl.u32 %v1458, 7
    %v1460 = vsub.s32 0, %v1459
    %v1461 = vrot.slane %v1451, %v1460
    %v1462 = vadd.f32 %v1456, %v1461
    %v1463 = vadd.f32 %v1457, %v1461
    %v1464 = vmax.f32 %v1462, 0.0
    %v1465 = vmax.f32 %v1463, 0.0
    %v1468 = vrot.slane %v1464, 5
    %v1469 = vrot.slane %v1468, 4
    %v1470 = vrot.slane %v1465, 5
    %v1471 = vrot.slane %v1470, 4
    %v1474 = vmax.f32 %v1464, %v1469
    %v1475 = vmax.f32 %v1465, %v1471
    %v1476 = vrot.slane %v1464, 6
    %v1477 = vrot.slane %v1476, 4
    %v1478 = vrot.slane %v1465, 6
    %v1479 = vrot.slane %v1478, 4
    %v1482 = vmax.f32 %v1474, %v1477
    %v1483 = vmax.f32 %v1475, %v1479
    %v1484 = vmax.f32 %v1482, 0.0
    %v1485 = vmax.f32 %v1483, 0.0
    %v1486 = vld [vmem:[%s5 + $0x4] sm:$0x1]
    %v1487 = vld [vmem:[%s5 + $0x9] sm:$0x1]
    %vm1488 = vcmask 516096
    %v1489 = vsel %vm1488, %v1484, 0.0
    %v1490 = vsel %vm1488, %v1485, 0.0
    %v1491 = vadd.f32 %v1489, %v1490
    %v1492 = vrot.slane %v1491, 4
    %v1493 = vadd.f32 %v1491, %v1492
    %v1494 = vrot.slane %v1493, 2
    %v1495 = vadd.f32 %v1493, %v1494
    %v1496 = vrot.slane %v1495, 1
    %v1497 = vadd.f32 %v1495, %v1496
    %v1498 = vrcp.pop 2.0
    %v1499 = vmul.f32 %v1497, %v1498
    %v1500 = vsub.f32 %v1484, %v1499
    %v1501 = vsub.f32 %v1485, %v1499
    %v1502 = vmul.f32 %v1500, %v1500
    %v1503 = vmul.f32 %v1501, %v1501
    %v1504 = vsel %vm1488, %v1502, 0.0
    %v1505 = vsel %vm1488, %v1503, 0.0
    %v1506 = vadd.f32 %v1504, %v1505
    %v1507 = vrot.slane %v1506, 4
    %v1508 = vadd.f32 %v1506, %v1507
    %v1509 = vrot.slane %v1508, 2
    %v1510 = vadd.f32 %v1508, %v1509
    %v1511 = vrot.slane %v1510, 1
    %v1512 = vadd.f32 %v1510, %v1511
    %v1513 = vmul.f32 %v1512, %v1498
    %v1514 = vadd.f32 %v1513, 1e-05
    %v1515 = vrsqrt.pop %v1514
    %v1516 = vmul.f32 %v1486, %v1515
    %v1517 = vmul.f32 %v1499, %v1516
    %v1518 = vsub.f32 %v1487, %v1517
    %v1519 = vmul.f32 %v1484, %v1516
    %v1520 = vmul.f32 %v1485, %v1516
    %v1521 = vadd.f32 %v1519, %v1518
    %v1522 = vadd.f32 %v1520, %v1518
    %v1523 = vld [vmem:[%s4] sm:$0xff]
    %v1524 = vld [vmem:[%s4 + $0x8] sm:$0xff]
    %v1525 = vld [vmem:[%s4 + $0x10] sm:$0xff]
    %v1526 = vld [vmem:[%s4 + $0x18] sm:$0xff]
    %v1527 = vld [vmem:[%s4 + $0x20] sm:$0xff]
    %v1528 = vld [vmem:[%s4 + $0x28] sm:$0xff]
    %v1529 = vld [vmem:[%s4 + $0x30] sm:$0xff]
    %v1530 = vld [vmem:[%s4 + $0x38] sm:$0xff]
    %v1531 = vld [vmem:[%s5 + $0xa] sm:$0x1]
    %v1532 = vlaneseq
    %v1533 = vshrl.u32 %v1532, 7
    %v1534 = vsub.s32 0, %v1533
    %v1535 = vrot.slane %v1531, %v1534
    %v1538 = vlaneseq
    %v1539 = vshrl.u32 %v1538, 7
    %v1540 = vsub.s32 0, %v1539
    %v1541 = vrot.slane %v1521, %v1540
    %v1542 = vlaneseq
    %v1543 = vshrl.u32 %v1542, 7
    %v1544 = vsub.s32 0, %v1543
    %v1545 = vrot.slane %v1522, %v1544
    %vm1546 = vcmask 1041409
    %v1547 = vsel %vm1546, %v1545, %v1541
    %v1548 = vsel %vm818, %v1547, 0
    %1550 = vmatprep.subr.mxu0 0.0
    %1551 = vmatpush1.msra.mxu0 %v1523
    %1552 = vmatprep.subr.mxu0 0.0
    %1553 = vmatpush1.msra.mxu0 %v1524
    %1554 = vmatprep.subr.mxu0 0.0
    %1555 = vmatpush1.msra.mxu0 %v1525
    %1556 = vmatprep.subr.mxu0 0.0
    %1557 = vmatpush1.msra.mxu0 %v1526
    %1558 = vmatprep.subr.mxu0 0.0
    %1559 = vmatpush1.msra.mxu0 %v1527
    %1560 = vmatprep.subr.mxu0 0.0
    %1561 = vmatpush1.msra.mxu0 %v1528
    %1562 = vmatprep.subr.mxu0 0.0
    %1563 = vmatpush1.msra.mxu0 %v1529
    %1564 = vmatprep.subr.mxu0 0.0
    %1565 = vmatpush1.msra.mxu0 %v1530
    %1566 = vmatprep.subr.mxu0 0.0
    %1567 = vmatpush1.msra.mxu0 0.0
    %1568 = vmatprep.subr.mxu0 0.0
    %1569 = vmatpush1.msra.mxu0 0.0
    %1570 = vmatprep.subr.mxu0 0.0
    %1571 = vmatpush1.msra.mxu0 0.0
    %1572 = vmatprep.subr.mxu0 0.0
    %1573 = vmatpush1.msra.mxu0 0.0
    %1574 = vmatprep.subr.mxu0 0.0
    %1575 = vmatpush1.msra.mxu0 0.0
    %1576 = vmatprep.subr.mxu0 0.0
    %1577 = vmatpush1.msra.mxu0 0.0
    %1578 = vmatprep.subr.mxu0 0.0
    %1579 = vmatpush1.msra.mxu0 0.0
    %1580 = vmatprep.subr.mxu0 0.0
    %1581 = vmatpush1.msra.mxu0 0.0
    %1582 = vmatprep.subr.mxu0 0.0
    %1583 = vmatpush1.msra.mxu0 0.0
    %1584 = vmatprep.subr.mxu0 0.0
    %1585 = vmatpush1.msra.mxu0 0.0
    %1586 = vmatprep.subr.mxu0 0.0
    %1587 = vmatpush1.msra.mxu0 0.0
    %1588 = vmatprep.subr.mxu0 0.0
    %1589 = vmatpush1.msra.mxu0 0.0
    %1590 = vmatprep.subr.mxu0 0.0
    %1591 = vmatpush1.msra.mxu0 0.0
    %1592 = vmatprep.subr.mxu0 0.0
    %1593 = vmatpush1.msra.mxu0 0.0
    %1594 = vmatprep.subr.mxu0 0.0
    %1595 = vmatpush1.msra.mxu0 0.0
    %1596 = vmatprep.subr.mxu0 0.0
    %1597 = vmatpush1.msra.mxu0 0.0
    %1598 = vmatprep.subr.mxu0 0.0
    %1599 = vmatpush1.msra.mxu0 0.0
    %1600 = vmatprep.subr.mxu0 0.0
    %1601 = vmatpush1.msra.mxu0 0.0
    %1602 = vmatprep.subr.mxu0 0.0
    %1603 = vmatpush1.msra.mxu0 0.0
    %1604 = vmatprep.subr.mxu0 0.0
    %1605 = vmatpush1.msra.mxu0 0.0
    %1606 = vmatprep.subr.mxu0 0.0
    %1607 = vmatpush1.msra.mxu0 0.0
    %1608 = vmatprep.subr.mxu0 0.0
    %1609 = vmatpush1.msra.mxu0 0.0
    %1610 = vmatprep.subr.mxu0 0.0
    %1611 = vmatpush1.msra.mxu0 0.0
    %1612 = vmatprep.subr.mxu0 0.0
    %1613 = vmatpush1.msra.mxu0 0.0
    %1614 = vmatprep.mubr.f32.mxu0 0.0
    %1615 = vmatmul.mubr.f32.gmra.mrb[0].mxu0 %v1548
    %v1616 = vpop.f32.mrb[0].mxu0
    %v1617 = vadd.f32 %v1535, %v1616
    %v1618 = vpop.f32.mrb[0].mxu0
    %1619 = vdwg.mxu0
    %1620 = vst [vmem:[#allocation3] sm:$0x3] %v1617
    // Predicated region
    $region26: #{tpu_custom_call.1} parent=1 // pred_check
      _
    $region27: #{tpu_custom_call.1} parent=1 // pred_check_branch
      %1622 = sbr.rel (0) target = $region29
    $region28: #{tpu_custom_call.1} parent=1 // pred_region
      %s1624 = ssub.s32 32, 32
      %1625 = vsyncadd [#allocation4], %s1624
      %s1627 = sshll.u32 [#allocation3], 4
      %s1628 = int_to_ptr.vmem [resolvable:$true] %s1627
      %1630 = dma.vmem_to_hbm [thread:$0]  %s1628, 32, %s6, [#allocation4]
    $region29: #{tpu_custom_call.1} parent=1 // pred_fallthru
      _
    // Predicated region
    $region30: #{tpu_custom_call.1} parent=1 // pred_check
      _
    $region31: #{tpu_custom_call.1} parent=1 // pred_check_branch
      %1632 = sbr.rel (0) target = $region33
    $region32: #{tpu_custom_call.1} parent=1 // pred_region
      %1633 = dma.done [#allocation4], 32
    $region33: #{tpu_custom_call.1} parent=1 // pred_fallthru
      _
    %1634 = vsyncpa [#allocation4], 1

</llo_original>
